<compile_context>
chip_gen: v7x
topology: tpu7x:2x2x1
jax: 0.10.0
libtpu: 0.0.40
codegen_flags: <defaults>
</compile_context>

<pallas_src>
import jax
import jax.numpy as jnp
from jax.experimental import pallas as pl
from jax.experimental.pallas import tpu as pltpu


# ----------------------------- configuration --------------------------------
N_ANS = 32            # args.n_ans
PACK = 4 * N_ANS      # = 128: lane-dense packed output width (one vreg span)
BATCH = 2
C, H, W = 4, 16, 16
SEQ = 8               # question length
N_OBJ = 6
OBJ_FEAT = 4

# Packed-parameter slab row layout (8 rows x 128 lanes, f32):
#   rows 0:4  w_img   (model_1 in lanes 0:32, model_2 in lanes 64:96)
#   row  4    w_q     (same lane split)
#   row  5    b_stub  (same lane split)
#   row  6    b_ac    (actor bias in lanes 0:32 and 32:64, critic bias lane 96)
#   row  7    zeros
_ROW_WIMG = 0
_ROW_WQ = C
_ROW_BSTUB = C + 1
_ROW_BAC = C + 2
SLAB_ROWS = 8

# Packed output lane layout (B, 128):
#   lanes 0:32   softmax(policy)
#   lanes 32:64  policy logits
#   lanes 64:96  model_out_2 (computed by the torch forward, unused by outputs)
#   lane  96     value
#   lanes 97:128 zero


# ------------------------------ Pallas kernel --------------------------------
def _learner_fused_kernel(img_ref, ques_ref, slab_ref, wac_ref, out_ref):
    # ---- shared reductions (computed once, reused by both model stubs) -----
    img = img_ref[...]                                        # (B, C, H*W) f32
    pooled = jnp.mean(img, axis=-1)                           # (B, C)
    q = jnp.mean(ques_ref[...].astype(jnp.float32),
                 axis=-1, keepdims=True)                      # (B, 1)

    slab = slab_ref[...]                                      # (8, 128)
    w_img = slab[_ROW_WIMG:_ROW_WIMG + C, :]                  # (C, 128)
    w_q = slab[_ROW_WQ:_ROW_WQ + 1, :]                        # (1, 128)
    b_st = slab[_ROW_BSTUB:_ROW_BSTUB + 1, :]                 # (1, 128)
    b_ac = slab[_ROW_BAC:_ROW_BAC + 1, :]                     # (1, 128)

    # TODO(synk): the real `Model` passed to Learner.__init__ is an external
    # graph-VQA network; this deterministic linear stand-in (spatial mean-pool
    # + linear projection to n_ans) takes its place.
    #
    # Fused stubs: one K=C VPU broadcast-FMA pass produces
    #   lanes 0:32  = model_out_1,  lanes 64:96 = model_out_2,  rest 0.
    m = q * w_q + b_st                                        # (B, 128)
    for c in range(C):                                        # K=4: VPU FMAs
        m = m + pooled[:, c:c + 1] * w_img[c:c + 1, :]

    # ---- fused actor + critic head on the MXU -------------------------------
    # w_ac: (128,128), rows 32:128 zero; columns 0:32 and 32:64 = actor_w.T,
    # column 96 = critic_w. relu(m2) lanes hit zero rows -> no effect.
    h = jnp.maximum(m, 0.0)                                   # nn.ReLU()
    ac = jnp.dot(h, wac_ref[...],
                 preferred_element_type=jnp.float32) + b_ac   # (B, 128)
    # ac: lanes 0:32 = logits (softmax copy), 32:64 = logits (final position),
    #     lane 96 = value, everything else 0 (zero-padded weights/bias).

    # ---- softmax over lanes 0:32, numerically stable, exact divide ----------
    lane = jax.lax.broadcasted_iota(jnp.int32, ac.shape, 1)   # (B, 128)
    neg = jnp.float32(-1e30)
    masked = jnp.where(lane < N_ANS, ac, neg)
    mx = jnp.max(masked, axis=-1, keepdims=True)
    e = jnp.exp(masked - mx)                                  # 0 on masked lanes
    denom = jnp.sum(e, axis=-1, keepdims=True)
    soft = e / denom                                          # rows sum to 1 exactly

    # ---- assemble one lane-dense (B, 128) slab, single unmasked store -------
    m2_part = jnp.where((lane >= 2 * N_ANS) & (lane < 3 * N_ANS), m, 0.0)
    head_part = jnp.where(lane >= N_ANS, ac, 0.0)             # drop softmax copy
    out_ref[...] = soft + head_part + m2_part


# ------------------------------ wrapper ---------------------------------------
def _vmem_spec():
    return pl.BlockSpec(memory_space=pltpu.MemorySpace.VMEM)


def learner_forward(params, img_feats, ques, objs, adj_mat,
                    ques_lens, num_obj, obj_wrds):
    """Mirrors Learner.forward. objs/adj_mat/ques_lens/num_obj/obj_wrds are
    accepted for signature fidelity; the Model stand-in only consumes
    img_feats and ques."""
    B, c, h, w = img_feats.shape
    img = img_feats.reshape(B, c, h * w)        # contiguous reshape (free)
    pk = params["packed"]

    packed = pl.pallas_call(
        _learner_fused_kernel,
        out_shape=jax.ShapeDtypeStruct((B, PACK), jnp.float32),
        in_specs=[_vmem_spec()] * 4,
        out_specs=_vmem_spec(),
    )(img, ques, pk["slab"], pk["w_ac"])

    policy_soft = packed[:, 0:N_ANS]
    policy_logits = packed[:, N_ANS:2 * N_ANS]
    value = packed[:, 3 * N_ANS:3 * N_ANS + 1]
    return policy_soft, value, policy_logits


# ---------------------------- parameter init ---------------------------------
def init_params(key):
    ks = jax.random.split(key, 6)

    def model_params(k):
        k1, k2, k3 = jax.random.split(k, 3)
        return {
            "w_img": 0.1 * jax.random.normal(k1, (C, N_ANS), jnp.float32),
            "w_q":   0.01 * jax.random.normal(k2, (1, N_ANS), jnp.float32),
            "b":     0.1 * jax.random.normal(k3, (1, N_ANS), jnp.float32),
        }

    m1 = model_params(ks[0])
    m2 = model_params(ks[1])

    # PyTorch-layout head params (nn.Linear stores weight as (out, in)).
    actor_w = 0.1 * jax.random.normal(ks[2], (N_ANS, N_ANS), jnp.float32)
    actor_b = 0.1 * jax.random.normal(ks[3], (N_ANS,), jnp.float32)
    critic_w = 0.1 * jax.random.normal(ks[4], (1, N_ANS), jnp.float32)
    critic_b = 0.1 * jax.random.normal(ks[5], (1,), jnp.float32)

    # ---- one-time packing (at init, not per call) ---------------------------
    slab = jnp.zeros((SLAB_ROWS, PACK), jnp.float32)
    slab = slab.at[_ROW_WIMG:_ROW_WIMG + C, 0:N_ANS].set(m1["w_img"])
    slab = slab.at[_ROW_WIMG:_ROW_WIMG + C, 2 * N_ANS:3 * N_ANS].set(m2["w_img"])
    slab = slab.at[_ROW_WQ, 0:N_ANS].set(m1["w_q"][0])
    slab = slab.at[_ROW_WQ, 2 * N_ANS:3 * N_ANS].set(m2["w_q"][0])
    slab = slab.at[_ROW_BSTUB, 0:N_ANS].set(m1["b"][0])
    slab = slab.at[_ROW_BSTUB, 2 * N_ANS:3 * N_ANS].set(m2["b"][0])
    slab = slab.at[_ROW_BAC, 0:N_ANS].set(actor_b)            # softmax copy
    slab = slab.at[_ROW_BAC, N_ANS:2 * N_ANS].set(actor_b)    # final position
    slab = slab.at[_ROW_BAC, 3 * N_ANS].set(critic_b[0])

    # Pre-positioned head weight: rows = relu(m) lanes (only 0:32 nonzero);
    # logits in columns 0:32 (softmax input copy) and 32:64 (final output
    # position); critic in column 96. Columns 64:96 and 97:127 MUST stay zero
    # (m2 / value lanes of the output rely on it).
    w_ac = jnp.zeros((PACK, PACK), jnp.float32)
    w_ac = w_ac.at[0:N_ANS, 0:N_ANS].set(actor_w.T)
    w_ac = w_ac.at[0:N_ANS, N_ANS:2 * N_ANS].set(actor_w.T)
    w_ac = w_ac.at[0:N_ANS, 3 * N_ANS].set(critic_w[0])

    return {
        "model_1": m1,
        "model_2": m2,
        "head": {"actor_w": actor_w, "actor_b": actor_b,
                 "critic_w": critic_w, "critic_b": critic_b},
        "packed": {"slab": slab, "w_ac": w_ac},
    }


# ---------------------------- pure-JAX reference ------------------------------
def learner_reference(params, img_feats, ques):
    B, c, h, w = img_feats.shape
    img = img_feats.reshape(B, c, h * w)
    pooled = jnp.mean(img, axis=-1)
    q = jnp.mean(ques.astype(jnp.float32), axis=-1, keepdims=True)
    hi = jax.lax.Precision.HIGHEST

    def stub(p):
        return jnp.dot(pooled, p["w_img"], precision=hi) + q * p["w_q"] + p["b"]

    m1 = stub(params["model_1"])
    m2 = stub(params["model_2"])      # computed by torch forward, unused output
    hd = params["head"]
    hr = jnp.maximum(m1, 0.0)
    policy = jnp.dot(hr, hd["actor_w"].T, precision=hi) + hd["actor_b"]
    value = jnp.dot(hr, hd["critic_w"].T, precision=hi) + hd["critic_b"]
    return jax.nn.softmax(policy, axis=-1), value, policy, m2


# --------------------------------- main ---------------------------------------
if __name__ == "__main__":
    key = jax.random.PRNGKey(0)
    kp, k_img, k_ques, k_objs, k_adj, k_ow = jax.random.split(key, 6)

    params = init_params(kp)

    img_feats = jax.random.normal(k_img, (BATCH, C, H, W), jnp.float32)   # NCHW
    ques = jax.random.randint(k_ques, (BATCH, SEQ), 0, 100, jnp.int32)
    objs = jax.random.normal(k_objs, (BATCH, N_OBJ, OBJ_FEAT), jnp.float32)
    adj_mat = (jax.random.uniform(k_adj, (BATCH, N_OBJ, N_OBJ)) > 0.5).astype(jnp.float32)
    ques_lens = jnp.full((BATCH,), SEQ, jnp.int32)
    num_obj = jnp.full((BATCH,), N_OBJ, jnp.int32)
    obj_wrds = jax.random.randint(k_ow, (BATCH, N_OBJ), 0, 50, jnp.int32)

    fwd = jax.jit(learner_forward)
    policy_soft, value, policy_logits = fwd(
        params, img_feats, ques, objs, adj_mat, ques_lens, num_obj, obj_wrds)
    jax.block_until_ready((policy_soft, value, policy_logits))

    # shape checks
    assert policy_soft.shape == (BATCH, N_ANS)
    assert value.shape == (BATCH, 1)
    assert policy_logits.shape == (BATCH, N_ANS)

    # numerical checks vs. pure-JAX reference
    ref_soft, ref_value, ref_policy, _ = learner_reference(params, img_feats, ques)
    assert jnp.allclose(policy_logits, ref_policy, atol=1e-2, rtol=1e-2)
    assert jnp.allclose(value, ref_value, atol=1e-2, rtol=1e-2)
    assert jnp.allclose(policy_soft, ref_soft, atol=5e-3, rtol=5e-3)
    # exact softmax divide -> rows sum to 1
    assert jnp.allclose(jnp.sum(policy_soft, axis=-1), 1.0, atol=1e-3)

    print("KERNEL_OK")
</pallas_src>

<mosaic_0001>
module attributes {stable_mosaic.version = 11 : i64} {
  func.func @_learner_fused_kernel(%arg0: memref<2x4x256xf32, #tpu.memory_space<vmem>>, %arg1: memref<2x8xi32, #tpu.memory_space<vmem>>, %arg2: memref<8x128xf32, #tpu.memory_space<vmem>>, %arg3: memref<128x128xf32, #tpu.memory_space<vmem>>, %arg4: memref<2x128xf32, #tpu.memory_space<vmem>>) attributes {dimension_semantics = [], scalar_prefetch = 0 : i64, scratch_operands = 0 : i64, tpu.core_type = #tpu.core_type<tc>} {
    %c0 = arith.constant 0 : index
    %c0_0 = arith.constant 0 : index
    %c0_1 = arith.constant 0 : index
    %0 = vector.load %arg0[%c0, %c0_0, %c0_1] : memref<2x4x256xf32, #tpu.memory_space<vmem>>, vector<2x4x256xf32>
    %cst = arith.constant dense<0.000000e+00> : vector<2x4xf32>
    %1 = vector.multi_reduction <add>, %0, %cst [2] : vector<2x4x256xf32> to vector<2x4xf32>
    %cst_2 = arith.constant 2.560000e+02 : f32
    %2 = vector.broadcast %cst_2 : f32 to vector<2x4xf32>
    %3 = arith.divf %1, %2 : vector<2x4xf32>
    %c0_3 = arith.constant 0 : index
    %c0_4 = arith.constant 0 : index
    %4 = vector.load %arg1[%c0_3, %c0_4] : memref<2x8xi32, #tpu.memory_space<vmem>>, vector<2x8xi32>
    %5 = arith.sitofp %4 : vector<2x8xi32> to vector<2x8xf32>
    %cst_5 = arith.constant dense<0.000000e+00> : vector<2xf32>
    %6 = vector.multi_reduction <add>, %5, %cst_5 [1] : vector<2x8xf32> to vector<2xf32>
    %7 = vector.shape_cast %6 : vector<2xf32> to vector<2x1xf32>
    %cst_6 = arith.constant 8.000000e+00 : f32
    %8 = vector.broadcast %cst_6 : f32 to vector<2x1xf32>
    %9 = arith.divf %7, %8 : vector<2x1xf32>
    %c0_7 = arith.constant 0 : index
    %c0_8 = arith.constant 0 : index
    %10 = vector.load %arg2[%c0_7, %c0_8] : memref<8x128xf32, #tpu.memory_space<vmem>>, vector<8x128xf32>
    %11 = vector.extract_strided_slice %10 {offsets = [0, 0], sizes = [4, 128], strides = [1, 1]} : vector<8x128xf32> to vector<4x128xf32>
    %12 = vector.extract_strided_slice %10 {offsets = [4, 0], sizes = [1, 128], strides = [1, 1]} : vector<8x128xf32> to vector<1x128xf32>
    %13 = vector.extract_strided_slice %10 {offsets = [5, 0], sizes = [1, 128], strides = [1, 1]} : vector<8x128xf32> to vector<1x128xf32>
    %14 = vector.extract_strided_slice %10 {offsets = [6, 0], sizes = [1, 128], strides = [1, 1]} : vector<8x128xf32> to vector<1x128xf32>
    %15 = vector.broadcast %9 : vector<2x1xf32> to vector<2x128xf32>
    %16 = vector.broadcast %12 : vector<1x128xf32> to vector<2x128xf32>
    %17 = arith.mulf %15, %16 : vector<2x128xf32>
    %18 = vector.broadcast %13 : vector<1x128xf32> to vector<2x128xf32>
    %19 = arith.addf %17, %18 : vector<2x128xf32>
    %20 = vector.extract_strided_slice %3 {offsets = [0, 0], sizes = [2, 1], strides = [1, 1]} : vector<2x4xf32> to vector<2x1xf32>
    %21 = vector.extract_strided_slice %11 {offsets = [0, 0], sizes = [1, 128], strides = [1, 1]} : vector<4x128xf32> to vector<1x128xf32>
    %22 = vector.broadcast %20 : vector<2x1xf32> to vector<2x128xf32>
    %23 = vector.broadcast %21 : vector<1x128xf32> to vector<2x128xf32>
    %24 = arith.mulf %22, %23 : vector<2x128xf32>
    %25 = arith.addf %19, %24 : vector<2x128xf32>
    %26 = vector.extract_strided_slice %3 {offsets = [0, 1], sizes = [2, 1], strides = [1, 1]} : vector<2x4xf32> to vector<2x1xf32>
    %27 = vector.extract_strided_slice %11 {offsets = [1, 0], sizes = [1, 128], strides = [1, 1]} : vector<4x128xf32> to vector<1x128xf32>
    %28 = vector.broadcast %26 : vector<2x1xf32> to vector<2x128xf32>
    %29 = vector.broadcast %27 : vector<1x128xf32> to vector<2x128xf32>
    %30 = arith.mulf %28, %29 : vector<2x128xf32>
    %31 = arith.addf %25, %30 : vector<2x128xf32>
    %32 = vector.extract_strided_slice %3 {offsets = [0, 2], sizes = [2, 1], strides = [1, 1]} : vector<2x4xf32> to vector<2x1xf32>
    %33 = vector.extract_strided_slice %11 {offsets = [2, 0], sizes = [1, 128], strides = [1, 1]} : vector<4x128xf32> to vector<1x128xf32>
    %34 = vector.broadcast %32 : vector<2x1xf32> to vector<2x128xf32>
    %35 = vector.broadcast %33 : vector<1x128xf32> to vector<2x128xf32>
    %36 = arith.mulf %34, %35 : vector<2x128xf32>
    %37 = arith.addf %31, %36 : vector<2x128xf32>
    %38 = vector.extract_strided_slice %3 {offsets = [0, 3], sizes = [2, 1], strides = [1, 1]} : vector<2x4xf32> to vector<2x1xf32>
    %39 = vector.extract_strided_slice %11 {offsets = [3, 0], sizes = [1, 128], strides = [1, 1]} : vector<4x128xf32> to vector<1x128xf32>
    %40 = vector.broadcast %38 : vector<2x1xf32> to vector<2x128xf32>
    %41 = vector.broadcast %39 : vector<1x128xf32> to vector<2x128xf32>
    %42 = arith.mulf %40, %41 : vector<2x128xf32>
    %43 = arith.addf %37, %42 : vector<2x128xf32>
    %cst_9 = arith.constant 0.000000e+00 : f32
    %44 = vector.broadcast %cst_9 : f32 to vector<2x128xf32>
    %45 = arith.maximumf %43, %44 : vector<2x128xf32>
    %c0_10 = arith.constant 0 : index
    %c0_11 = arith.constant 0 : index
    %46 = vector.load %arg3[%c0_10, %c0_11] : memref<128x128xf32, #tpu.memory_space<vmem>>, vector<128x128xf32>
    %cst_12 = arith.constant dense<0.000000e+00> : vector<2x128xf32>
    %47 = tpu.matmul %45, %46, %cst_12 {dimension_numbers = #tpu.dot_dimension_numbers<[1], [0], [0], [1], [0, 0, 1, 1], [], []>} : vector<2x128xf32>, vector<128x128xf32>, vector<2x128xf32> -> vector<2x128xf32>
    %48 = vector.broadcast %14 : vector<1x128xf32> to vector<2x128xf32>
    %49 = arith.addf %47, %48 : vector<2x128xf32>
    %50 = tpu.iota {dimensions = array<i32: 1>} : vector<2x128xi32>
    %c32_i32 = arith.constant 32 : i32
    %51 = vector.broadcast %c32_i32 : i32 to vector<2x128xi32>
    %52 = arith.cmpi slt, %50, %51 : vector<2x128xi32>
    %cst_13 = arith.constant -1.000000e+30 : f32
    %53 = vector.broadcast %cst_13 : f32 to vector<2x128xf32>
    %54 = arith.select %52, %49, %53 : vector<2x128xi1>, vector<2x128xf32>
    %cst_14 = arith.constant dense<0xFF800000> : vector<2xf32>
    %55 = vector.multi_reduction <maximumf>, %54, %cst_14 [1] : vector<2x128xf32> to vector<2xf32>
    %56 = vector.shape_cast %55 : vector<2xf32> to vector<2x1xf32>
    %57 = vector.broadcast %56 : vector<2x1xf32> to vector<2x128xf32>
    %58 = arith.subf %54, %57 : vector<2x128xf32>
    %59 = math.exp %58 : vector<2x128xf32>
    %cst_15 = arith.constant dense<0.000000e+00> : vector<2xf32>
    %60 = vector.multi_reduction <add>, %59, %cst_15 [1] : vector<2x128xf32> to vector<2xf32>
    %61 = vector.shape_cast %60 : vector<2xf32> to vector<2x1xf32>
    %62 = vector.broadcast %61 : vector<2x1xf32> to vector<2x128xf32>
    %63 = arith.divf %59, %62 : vector<2x128xf32>
    %c64_i32 = arith.constant 64 : i32
    %64 = vector.broadcast %c64_i32 : i32 to vector<2x128xi32>
    %65 = arith.cmpi sge, %50, %64 : vector<2x128xi32>
    %c96_i32 = arith.constant 96 : i32
    %66 = vector.broadcast %c96_i32 : i32 to vector<2x128xi32>
    %67 = arith.cmpi slt, %50, %66 : vector<2x128xi32>
    %68 = arith.andi %65, %67 : vector<2x128xi1>
    %cst_16 = arith.constant 0.000000e+00 : f32
    %69 = vector.broadcast %cst_16 : f32 to vector<2x128xf32>
    %70 = arith.select %68, %43, %69 : vector<2x128xi1>, vector<2x128xf32>
    %c32_i32_17 = arith.constant 32 : i32
    %71 = vector.broadcast %c32_i32_17 : i32 to vector<2x128xi32>
    %72 = arith.cmpi sge, %50, %71 : vector<2x128xi32>
    %cst_18 = arith.constant 0.000000e+00 : f32
    %73 = vector.broadcast %cst_18 : f32 to vector<2x128xf32>
    %74 = arith.select %72, %49, %73 : vector<2x128xi1>, vector<2x128xf32>
    %75 = arith.addf %63, %74 : vector<2x128xf32>
    %76 = arith.addf %75, %70 : vector<2x128xf32>
    %c0_19 = arith.constant 0 : index
    %c0_20 = arith.constant 0 : index
    %77 = vector.load %arg4[%c0_19, %c0_20] : memref<2x128xf32, #tpu.memory_space<vmem>>, vector<2x128xf32>
    tpu.vector_store %arg4[%c0_19, %c0_20], %76 {strides = array<i32>} : memref<2x128xf32, #tpu.memory_space<vmem>>, vector<2x128xf32>,
    return
  }
}

</mosaic_0001>

<llo_original>
// kernel: learner_forward.1
$region0: #{learner_forward.1}
  #allocation0 [shape = 'u32[]', space=smem, size = 0x4, offset = 0x4, fixed_abs, tag = 'smem constant byte address 0x4 - core index']
  #allocation1 [shape = 'u32[144,128]{1,0:T(1,128)}', space=vmem, size = 0x12000, scoped, tag = 'internal scratch']
  %s0 = inlined_call_operand.vmem [shape: f32[2,4,256], index: 0, kind: input, shape index: {}]
  %s1 = inlined_call_operand.vmem [shape: s32[2,8], index: 1, kind: input, shape index: {}]
  %s2 = inlined_call_operand.vmem [shape: f32[8,128], index: 2, kind: input, shape index: {}]
  %s3 = inlined_call_operand.vmem [shape: f32[128,128], index: 3, kind: input, shape index: {}]
  %s4 = inlined_call_operand.vmem [shape: f32[2,128], index: 4, kind: output, shape index: {}]
  %s5 = sld [smem:[#allocation0]]
  $region26: #{learner_forward.1} parent=0
    _
  %s7 = ssub.s32 1, %s5
  %s8 = scalar_select 0, %s7, %s5
  // Predicated region
  $region2: #{learner_forward.1} parent=0 // pred_check
    _
  $region3: #{learner_forward.1} parent=0 // pred_check_branch
    %10 = sbr.rel (0) target = $region5
  $region4: #{learner_forward.1} parent=0 // pred_region
    _
  $region5: #{learner_forward.1} parent=0 // pred_fallthru
    _
  // Predicated region
  $region6: #{learner_forward.1} parent=0 // pred_check
    _
  $region7: #{learner_forward.1} parent=0 // pred_check_branch
    %12 = sbr.rel (0) target = $region9
  $region8: #{learner_forward.1} parent=0 // pred_region
    _
  $region9: #{learner_forward.1} parent=0 // pred_fallthru
    _
  // Predicated region
  $region10: #{learner_forward.1} parent=0 // pred_check
    _
  $region11: #{learner_forward.1} parent=0 // pred_check_branch
    %14 = sbr.rel (0) target = $region13
  $region12: #{learner_forward.1} parent=0 // pred_region
    _
  $region13: #{learner_forward.1} parent=0 // pred_fallthru
    _
  // Predicated region
  $region14: #{learner_forward.1} parent=0 // pred_check
    _
  $region15: #{learner_forward.1} parent=0 // pred_check_branch
    %16 = sbr.rel (0) target = $region17
  $region16: #{learner_forward.1} parent=0 // pred_region
    _
  $region17: #{learner_forward.1} parent=0 // pred_fallthru
    _
  %v17 = vld [vmem:[%s0] sm:$0xff]
  %v18 = vld [vmem:[%s0 + $0x8] sm:$0xff]
  %v21 = vcombine.high %v17, %v17
  %v22 = vcombine.high %v18, %v18
  %vm25 = vcmask 1043456
  %v26 = vsel %vm25, %v17, 0.0
  %v27 = vsel %vm25, %v21, 0.0
  %v28 = vadd.f32 %v26, %v27
  %29 = vadd.xlane.f32.xlu0 %v28
  %v30 = vpop.xlane.xlu0 %29
  %v31 = vsel %vm25, %v18, 0.0
  %v32 = vsel %vm25, %v22, 0.0
  %v33 = vadd.f32 %v31, %v32
  %34 = vadd.xlane.f32.xlu0 %v33
  %v35 = vpop.xlane.xlu0 %34
  %v36 = vrcp.pop 256.0
  %v37 = vmul.f32 %v30, %v36
  %v38 = vmul.f32 %v35, %v36
  %v39 = vld [vmem:[%s1] sm:$0x3]
  %v40 = vcvt.s32.f32 %v39
  %vm41 = vcmask 58368
  %v42 = vsel %vm41, %v40, 0.0
  %43 = vadd.xlane.f32.xlu0 %v42
  %v44 = vpop.xlane.xlu0 %43
  %v45 = vrcp.pop 8.0
  %v46 = vmul.f32 %v44, %v45
  %v47 = vld [vmem:[%s2] sm:$0xff]
  %v48 = vlaneseq
  %v49 = vshrl.u32 %v48, 7
  %v50 = vsub.s32 4, %v49
  %v51 = vrot.slane %v47, %v50
  %v52 = vmul.f32 %v46, %v51
  %v53 = vlaneseq
  %v54 = vshrl.u32 %v53, 7
  %v55 = vsub.s32 5, %v54
  %v56 = vrot.slane %v47, %v55
  %v57 = vadd.f32 %v52, %v56
  %v58 = vlaneseq
  %v59 = vshrl.u32 %v58, 7
  %v60 = vsub.s32 0, %v59
  %v61 = vrot.slane %v37, %v60
  %v62 = vlaneseq
  %v63 = vshrl.u32 %v62, 7
  %v64 = vsub.s32 0, %v63
  %v65 = vrot.slane %v38, %v64
  %v66 = vlaneseq
  %v67 = vshrl.u32 %v66, 7
  %v68 = vsub.s32 0, %v67
  %v69 = vrot.slane %v47, %v68
  %72 = vbcast.lane.b32.xlu0 %v69, 256
  %v73 = vpop.permute.xlu0 %72
  %s75 = sor.u32 256, 8
  %76 = vbcast.lane.b32.xlu0 %v69, %s75
  %v77 = vpop.permute.xlu0 %76
  %s79 = sor.u32 256, 16
  %80 = vbcast.lane.b32.xlu0 %v69, %s79
  %v81 = vpop.permute.xlu0 %80
  %s83 = sor.u32 256, 24
  %84 = vbcast.lane.b32.xlu0 %v69, %s83
  %v85 = vpop.permute.xlu0 %84
  %s87 = sor.u32 256, 32
  %88 = vbcast.lane.b32.xlu0 %v69, %s87
  %v89 = vpop.permute.xlu0 %88
  %s91 = sor.u32 256, 40
  %92 = vbcast.lane.b32.xlu0 %v69, %s91
  %v93 = vpop.permute.xlu0 %92
  %s95 = sor.u32 256, 48
  %96 = vbcast.lane.b32.xlu0 %v69, %s95
  %v97 = vpop.permute.xlu0 %96
  %s99 = sor.u32 256, 56
  %100 = vbcast.lane.b32.xlu0 %v69, %s99
  %v101 = vpop.permute.xlu0 %100
  %s103 = sor.u32 256, 64
  %104 = vbcast.lane.b32.xlu0 %v69, %s103
  %v105 = vpop.permute.xlu0 %104
  %s107 = sor.u32 256, 72
  %108 = vbcast.lane.b32.xlu0 %v69, %s107
  %v109 = vpop.permute.xlu0 %108
  %s111 = sor.u32 256, 80
  %112 = vbcast.lane.b32.xlu0 %v69, %s111
  %v113 = vpop.permute.xlu0 %112
  %s115 = sor.u32 256, 88
  %116 = vbcast.lane.b32.xlu0 %v69, %s115
  %v117 = vpop.permute.xlu0 %116
  %s119 = sor.u32 256, 96
  %120 = vbcast.lane.b32.xlu0 %v69, %s119
  %v121 = vpop.permute.xlu0 %120
  %s123 = sor.u32 256, 104
  %124 = vbcast.lane.b32.xlu0 %v69, %s123
  %v125 = vpop.permute.xlu0 %124
  %s127 = sor.u32 256, 112
  %128 = vbcast.lane.b32.xlu0 %v69, %s127
  %v129 = vpop.permute.xlu0 %128
  %s131 = sor.u32 256, 120
  %132 = vbcast.lane.b32.xlu0 %v69, %s131
  %v133 = vpop.permute.xlu0 %132
  %v150 = vmul.f32 %v61, %v73
  %v151 = vmul.f32 %v61, %v77
  %v152 = vmul.f32 %v61, %v81
  %v153 = vmul.f32 %v61, %v85
  %v154 = vmul.f32 %v61, %v89
  %v155 = vmul.f32 %v61, %v93
  %v156 = vmul.f32 %v61, %v97
  %v157 = vmul.f32 %v61, %v101
  %v158 = vmul.f32 %v61, %v105
  %v159 = vmul.f32 %v61, %v109
  %v160 = vmul.f32 %v61, %v113
  %v161 = vmul.f32 %v61, %v117
  %v162 = vmul.f32 %v61, %v121
  %v163 = vmul.f32 %v61, %v125
  %v164 = vmul.f32 %v61, %v129
  %v165 = vmul.f32 %v61, %v133
  %v166 = vmul.f32 %v65, %v73
  %v167 = vmul.f32 %v65, %v77
  %v168 = vmul.f32 %v65, %v81
  %v169 = vmul.f32 %v65, %v85
  %v170 = vmul.f32 %v65, %v89
  %v171 = vmul.f32 %v65, %v93
  %v172 = vmul.f32 %v65, %v97
  %v173 = vmul.f32 %v65, %v101
  %v174 = vmul.f32 %v65, %v105
  %v175 = vmul.f32 %v65, %v109
  %v176 = vmul.f32 %v65, %v113
  %v177 = vmul.f32 %v65, %v117
  %v178 = vmul.f32 %v65, %v121
  %v179 = vmul.f32 %v65, %v125
  %v180 = vmul.f32 %v65, %v129
  %v181 = vmul.f32 %v65, %v133
  %214 = vset.pattern.permute.xlu0 0
  %215 = vperm.xlu0 %214, %v150
  %v216 = vpop.permute.xlu0 %215
  %217 = vset.pattern.permute.xlu0 0
  %218 = vperm.xlu0 %217, %v151
  %v219 = vpop.permute.xlu0 %218
  %220 = vset.pattern.permute.xlu0 0
  %221 = vperm.xlu0 %220, %v152
  %v222 = vpop.permute.xlu0 %221
  %223 = vset.pattern.permute.xlu0 0
  %224 = vperm.xlu0 %223, %v153
  %v225 = vpop.permute.xlu0 %224
  %226 = vset.pattern.permute.xlu0 0
  %227 = vperm.xlu0 %226, %v154
  %v228 = vpop.permute.xlu0 %227
  %229 = vset.pattern.permute.xlu0 0
  %230 = vperm.xlu0 %229, %v155
  %v231 = vpop.permute.xlu0 %230
  %232 = vset.pattern.permute.xlu0 0
  %233 = vperm.xlu0 %232, %v156
  %v234 = vpop.permute.xlu0 %233
  %235 = vset.pattern.permute.xlu0 0
  %236 = vperm.xlu0 %235, %v157
  %v237 = vpop.permute.xlu0 %236
  %238 = vset.pattern.permute.xlu0 0
  %239 = vperm.xlu0 %238, %v158
  %v240 = vpop.permute.xlu0 %239
  %241 = vset.pattern.permute.xlu0 0
  %242 = vperm.xlu0 %241, %v159
  %v243 = vpop.permute.xlu0 %242
  %244 = vset.pattern.permute.xlu0 0
  %245 = vperm.xlu0 %244, %v160
  %v246 = vpop.permute.xlu0 %245
  %247 = vset.pattern.permute.xlu0 0
  %248 = vperm.xlu0 %247, %v161
  %v249 = vpop.permute.xlu0 %248
  %250 = vset.pattern.permute.xlu0 0
  %251 = vperm.xlu0 %250, %v162
  %v252 = vpop.permute.xlu0 %251
  %253 = vset.pattern.permute.xlu0 0
  %254 = vperm.xlu0 %253, %v163
  %v255 = vpop.permute.xlu0 %254
  %256 = vset.pattern.permute.xlu0 0
  %257 = vperm.xlu0 %256, %v164
  %v258 = vpop.permute.xlu0 %257
  %259 = vset.pattern.permute.xlu0 0
  %260 = vperm.xlu0 %259, %v165
  %v261 = vpop.permute.xlu0 %260
  %262 = vset.pattern.permute.xlu0 0
  %263 = vperm.xlu0 %262, %v166
  %v264 = vpop.permute.xlu0 %263
  %265 = vset.pattern.permute.xlu0 0
  %266 = vperm.xlu0 %265, %v167
  %v267 = vpop.permute.xlu0 %266
  %268 = vset.pattern.permute.xlu0 0
  %269 = vperm.xlu0 %268, %v168
  %v270 = vpop.permute.xlu0 %269
  %271 = vset.pattern.permute.xlu0 0
  %272 = vperm.xlu0 %271, %v169
  %v273 = vpop.permute.xlu0 %272
  %274 = vset.pattern.permute.xlu0 0
  %275 = vperm.xlu0 %274, %v170
  %v276 = vpop.permute.xlu0 %275
  %277 = vset.pattern.permute.xlu0 0
  %278 = vperm.xlu0 %277, %v171
  %v279 = vpop.permute.xlu0 %278
  %280 = vset.pattern.permute.xlu0 0
  %281 = vperm.xlu0 %280, %v172
  %v282 = vpop.permute.xlu0 %281
  %283 = vset.pattern.permute.xlu0 0
  %284 = vperm.xlu0 %283, %v173
  %v285 = vpop.permute.xlu0 %284
  %286 = vset.pattern.permute.xlu0 0
  %287 = vperm.xlu0 %286, %v174
  %v288 = vpop.permute.xlu0 %287
  %289 = vset.pattern.permute.xlu0 0
  %290 = vperm.xlu0 %289, %v175
  %v291 = vpop.permute.xlu0 %290
  %292 = vset.pattern.permute.xlu0 0
  %293 = vperm.xlu0 %292, %v176
  %v294 = vpop.permute.xlu0 %293
  %295 = vset.pattern.permute.xlu0 0
  %296 = vperm.xlu0 %295, %v177
  %v297 = vpop.permute.xlu0 %296
  %298 = vset.pattern.permute.xlu0 0
  %299 = vperm.xlu0 %298, %v178
  %v300 = vpop.permute.xlu0 %299
  %301 = vset.pattern.permute.xlu0 0
  %302 = vperm.xlu0 %301, %v179
  %v303 = vpop.permute.xlu0 %302
  %304 = vset.pattern.permute.xlu0 0
  %305 = vperm.xlu0 %304, %v180
  %v306 = vpop.permute.xlu0 %305
  %307 = vset.pattern.permute.xlu0 0
  %308 = vperm.xlu0 %307, %v181
  %v309 = vpop.permute.xlu0 %308
  %v310 = vlaneseq
  %v311 = vand.u32 %v310, 127
  %v312 = vlaneseq
  %v313 = vshrl.u32 %v312, 7
  %v314 = vsub.s32 %v311, %v313
  %v315 = vrot.slane %v216, %v314
  %v316 = vadd.s32 %v311, 4294967288
  %v317 = vlaneseq
  %v318 = vshrl.u32 %v317, 7
  %v319 = vsub.s32 %v316, %v318
  %v320 = vrot.slane %v219, %v319
  %vm321 = vcmask 130112
  %v322 = vsel %vm321, %v320, %v315
  %v323 = vadd.s32 %v311, 4294967280
  %v324 = vlaneseq
  %v325 = vshrl.u32 %v324, 7
  %v326 = vsub.s32 %v323, %v325
  %v327 = vrot.slane %v222, %v326
  %vm328 = vcmask 195712
  %v329 = vsel %vm328, %v327, %v322
  %v330 = vadd.s32 %v311, 4294967272
  %v331 = vlaneseq
  %v332 = vshrl.u32 %v331, 7
  %v333 = vsub.s32 %v330, %v332
  %v334 = vrot.slane %v225, %v333
  %vm335 = vcmask 261312
  %v336 = vsel %vm335, %v334, %v329
  %v337 = vadd.s32 %v311, 4294967264
  %v338 = vlaneseq
  %v339 = vshrl.u32 %v338, 7
  %v340 = vsub.s32 %v337, %v339
  %v341 = vrot.slane %v228, %v340
  %vm342 = vcmask 326912
  %v343 = vsel %vm342, %v341, %v336
  %v344 = vadd.s32 %v311, 4294967256
  %v345 = vlaneseq
  %v346 = vshrl.u32 %v345, 7
  %v347 = vsub.s32 %v344, %v346
  %v348 = vrot.slane %v231, %v347
  %vm349 = vcmask 392512
  %v350 = vsel %vm349, %v348, %v343
  %v351 = vadd.s32 %v311, 4294967248
  %v352 = vlaneseq
  %v353 = vshrl.u32 %v352, 7
  %v354 = vsub.s32 %v351, %v353
  %v355 = vrot.slane %v234, %v354
  %vm356 = vcmask 458112
  %v357 = vsel %vm356, %v355, %v350
  %v358 = vadd.s32 %v311, 4294967240
  %v359 = vlaneseq
  %v360 = vshrl.u32 %v359, 7
  %v361 = vsub.s32 %v358, %v360
  %v362 = vrot.slane %v237, %v361
  %vm363 = vcmask 523712
  %v364 = vsel %vm363, %v362, %v357
  %v365 = vadd.s32 %v311, 4294967232
  %v366 = vlaneseq
  %v367 = vshrl.u32 %v366, 7
  %v368 = vsub.s32 %v365, %v367
  %v369 = vrot.slane %v240, %v368
  %vm370 = vcmask 589312
  %v371 = vsel %vm370, %v369, %v364
  %v372 = vadd.s32 %v311, 4294967224
  %v373 = vlaneseq
  %v374 = vshrl.u32 %v373, 7
  %v375 = vsub.s32 %v372, %v374
  %v376 = vrot.slane %v243, %v375
  %vm377 = vcmask 654912
  %v378 = vsel %vm377, %v376, %v371
  %v379 = vadd.s32 %v311, 4294967216
  %v380 = vlaneseq
  %v381 = vshrl.u32 %v380, 7
  %v382 = vsub.s32 %v379, %v381
  %v383 = vrot.slane %v246, %v382
  %vm384 = vcmask 720512
  %v385 = vsel %vm384, %v383, %v378
  %v386 = vadd.s32 %v311, 4294967208
  %v387 = vlaneseq
  %v388 = vshrl.u32 %v387, 7
  %v389 = vsub.s32 %v386, %v388
  %v390 = vrot.slane %v249, %v389
  %vm391 = vcmask 786112
  %v392 = vsel %vm391, %v390, %v385
  %v393 = vadd.s32 %v311, 4294967200
  %v394 = vlaneseq
  %v395 = vshrl.u32 %v394, 7
  %v396 = vsub.s32 %v393, %v395
  %v397 = vrot.slane %v252, %v396
  %vm398 = vcmask 851712
  %v399 = vsel %vm398, %v397, %v392
  %v400 = vadd.s32 %v311, 4294967192
  %v401 = vlaneseq
  %v402 = vshrl.u32 %v401, 7
  %v403 = vsub.s32 %v400, %v402
  %v404 = vrot.slane %v255, %v403
  %vm405 = vcmask 917312
  %v406 = vsel %vm405, %v404, %v399
  %v407 = vadd.s32 %v311, 4294967184
  %v408 = vlaneseq
  %v409 = vshrl.u32 %v408, 7
  %v410 = vsub.s32 %v407, %v409
  %v411 = vrot.slane %v258, %v410
  %vm412 = vcmask 982912
  %v413 = vsel %vm412, %v411, %v406
  %v414 = vadd.s32 %v311, 4294967176
  %v415 = vlaneseq
  %v416 = vshrl.u32 %v415, 7
  %v417 = vsub.s32 %v414, %v416
  %v418 = vrot.slane %v261, %v417
  %vm419 = vcmask 1048512
  %v420 = vsel %vm419, %v418, %v413
  %v421 = vlaneseq
  %v422 = vshrl.u32 %v421, 7
  %v423 = vsub.s32 %v311, %v422
  %v424 = vrot.slane %v264, %v423
  %v425 = vlaneseq
  %v426 = vshrl.u32 %v425, 7
  %v427 = vsub.s32 %v316, %v426
  %v428 = vrot.slane %v267, %v427
  %v429 = vsel %vm321, %v428, %v424
  %v430 = vlaneseq
  %v431 = vshrl.u32 %v430, 7
  %v432 = vsub.s32 %v323, %v431
  %v433 = vrot.slane %v270, %v432
  %v434 = vsel %vm328, %v433, %v429
  %v435 = vlaneseq
  %v436 = vshrl.u32 %v435, 7
  %v437 = vsub.s32 %v330, %v436
  %v438 = vrot.slane %v273, %v437
  %v439 = vsel %vm335, %v438, %v434
  %v440 = vlaneseq
  %v441 = vshrl.u32 %v440, 7
  %v442 = vsub.s32 %v337, %v441
  %v443 = vrot.slane %v276, %v442
  %v444 = vsel %vm342, %v443, %v439
  %v445 = vlaneseq
  %v446 = vshrl.u32 %v445, 7
  %v447 = vsub.s32 %v344, %v446
  %v448 = vrot.slane %v279, %v447
  %v449 = vsel %vm349, %v448, %v444
  %v450 = vlaneseq
  %v451 = vshrl.u32 %v450, 7
  %v452 = vsub.s32 %v351, %v451
  %v453 = vrot.slane %v282, %v452
  %v454 = vsel %vm356, %v453, %v449
  %v455 = vlaneseq
  %v456 = vshrl.u32 %v455, 7
  %v457 = vsub.s32 %v358, %v456
  %v458 = vrot.slane %v285, %v457
  %v459 = vsel %vm363, %v458, %v454
  %v460 = vlaneseq
  %v461 = vshrl.u32 %v460, 7
  %v462 = vsub.s32 %v365, %v461
  %v463 = vrot.slane %v288, %v462
  %v464 = vsel %vm370, %v463, %v459
  %v465 = vlaneseq
  %v466 = vshrl.u32 %v465, 7
  %v467 = vsub.s32 %v372, %v466
  %v468 = vrot.slane %v291, %v467
  %v469 = vsel %vm377, %v468, %v464
  %v470 = vlaneseq
  %v471 = vshrl.u32 %v470, 7
  %v472 = vsub.s32 %v379, %v471
  %v473 = vrot.slane %v294, %v472
  %v474 = vsel %vm384, %v473, %v469
  %v475 = vlaneseq
  %v476 = vshrl.u32 %v475, 7
  %v477 = vsub.s32 %v386, %v476
  %v478 = vrot.slane %v297, %v477
  %v479 = vsel %vm391, %v478, %v474
  %v480 = vlaneseq
  %v481 = vshrl.u32 %v480, 7
  %v482 = vsub.s32 %v393, %v481
  %v483 = vrot.slane %v300, %v482
  %v484 = vsel %vm398, %v483, %v479
  %v485 = vlaneseq
  %v486 = vshrl.u32 %v485, 7
  %v487 = vsub.s32 %v400, %v486
  %v488 = vrot.slane %v303, %v487
  %v489 = vsel %vm405, %v488, %v484
  %v490 = vlaneseq
  %v491 = vshrl.u32 %v490, 7
  %v492 = vsub.s32 %v407, %v491
  %v493 = vrot.slane %v306, %v492
  %v494 = vsel %vm412, %v493, %v489
  %v495 = vlaneseq
  %v496 = vshrl.u32 %v495, 7
  %v497 = vsub.s32 %v414, %v496
  %v498 = vrot.slane %v309, %v497
  %v499 = vsel %vm419, %v498, %v494
  %vm500 = vcmask 1041409
  %v501 = vsel %vm500, %v499, %v420
  %v503 = vadd.f32 %v57, %v501
  %v504 = vlaneseq
  %v505 = vshrl.u32 %v504, 7
  %v506 = vsub.s32 1, %v505
  %v507 = vrot.slane %v37, %v506
  %v508 = vlaneseq
  %v509 = vshrl.u32 %v508, 7
  %v510 = vsub.s32 1, %v509
  %v511 = vrot.slane %v38, %v510
  %v512 = vlaneseq
  %v513 = vshrl.u32 %v512, 7
  %v514 = vsub.s32 1, %v513
  %v515 = vrot.slane %v47, %v514
  %518 = vbcast.lane.b32.xlu0 %v515, 256
  %v519 = vpop.permute.xlu0 %518
  %s521 = sor.u32 256, 8
  %522 = vbcast.lane.b32.xlu0 %v515, %s521
  %v523 = vpop.permute.xlu0 %522
  %s525 = sor.u32 256, 16
  %526 = vbcast.lane.b32.xlu0 %v515, %s525
  %v527 = vpop.permute.xlu0 %526
  %s529 = sor.u32 256, 24
  %530 = vbcast.lane.b32.xlu0 %v515, %s529
  %v531 = vpop.permute.xlu0 %530
  %s533 = sor.u32 256, 32
  %534 = vbcast.lane.b32.xlu0 %v515, %s533
  %v535 = vpop.permute.xlu0 %534
  %s537 = sor.u32 256, 40
  %538 = vbcast.lane.b32.xlu0 %v515, %s537
  %v539 = vpop.permute.xlu0 %538
  %s541 = sor.u32 256, 48
  %542 = vbcast.lane.b32.xlu0 %v515, %s541
  %v543 = vpop.permute.xlu0 %542
  %s545 = sor.u32 256, 56
  %546 = vbcast.lane.b32.xlu0 %v515, %s545
  %v547 = vpop.permute.xlu0 %546
  %s549 = sor.u32 256, 64
  %550 = vbcast.lane.b32.xlu0 %v515, %s549
  %v551 = vpop.permute.xlu0 %550
  %s553 = sor.u32 256, 72
  %554 = vbcast.lane.b32.xlu0 %v515, %s553
  %v555 = vpop.permute.xlu0 %554
  %s557 = sor.u32 256, 80
  %558 = vbcast.lane.b32.xlu0 %v515, %s557
  %v559 = vpop.permute.xlu0 %558
  %s561 = sor.u32 256, 88
  %562 = vbcast.lane.b32.xlu0 %v515, %s561
  %v563 = vpop.permute.xlu0 %562
  %s565 = sor.u32 256, 96
  %566 = vbcast.lane.b32.xlu0 %v515, %s565
  %v567 = vpop.permute.xlu0 %566
  %s569 = sor.u32 256, 104
  %570 = vbcast.lane.b32.xlu0 %v515, %s569
  %v571 = vpop.permute.xlu0 %570
  %s573 = sor.u32 256, 112
  %574 = vbcast.lane.b32.xlu0 %v515, %s573
  %v575 = vpop.permute.xlu0 %574
  %s577 = sor.u32 256, 120
  %578 = vbcast.lane.b32.xlu0 %v515, %s577
  %v579 = vpop.permute.xlu0 %578
  %v596 = vmul.f32 %v507, %v519
  %v597 = vmul.f32 %v507, %v523
  %v598 = vmul.f32 %v507, %v527
  %v599 = vmul.f32 %v507, %v531
  %v600 = vmul.f32 %v507, %v535
  %v601 = vmul.f32 %v507, %v539
  %v602 = vmul.f32 %v507, %v543
  %v603 = vmul.f32 %v507, %v547
  %v604 = vmul.f32 %v507, %v551
  %v605 = vmul.f32 %v507, %v555
  %v606 = vmul.f32 %v507, %v559
  %v607 = vmul.f32 %v507, %v563
  %v608 = vmul.f32 %v507, %v567
  %v609 = vmul.f32 %v507, %v571
  %v610 = vmul.f32 %v507, %v575
  %v611 = vmul.f32 %v507, %v579
  %v612 = vmul.f32 %v511, %v519
  %v613 = vmul.f32 %v511, %v523
  %v614 = vmul.f32 %v511, %v527
  %v615 = vmul.f32 %v511, %v531
  %v616 = vmul.f32 %v511, %v535
  %v617 = vmul.f32 %v511, %v539
  %v618 = vmul.f32 %v511, %v543
  %v619 = vmul.f32 %v511, %v547
  %v620 = vmul.f32 %v511, %v551
  %v621 = vmul.f32 %v511, %v555
  %v622 = vmul.f32 %v511, %v559
  %v623 = vmul.f32 %v511, %v563
  %v624 = vmul.f32 %v511, %v567
  %v625 = vmul.f32 %v511, %v571
  %v626 = vmul.f32 %v511, %v575
  %v627 = vmul.f32 %v511, %v579
  %660 = vset.pattern.permute.xlu0 0
  %661 = vperm.xlu0 %660, %v596
  %v662 = vpop.permute.xlu0 %661
  %663 = vset.pattern.permute.xlu0 0
  %664 = vperm.xlu0 %663, %v597
  %v665 = vpop.permute.xlu0 %664
  %666 = vset.pattern.permute.xlu0 0
  %667 = vperm.xlu0 %666, %v598
  %v668 = vpop.permute.xlu0 %667
  %669 = vset.pattern.permute.xlu0 0
  %670 = vperm.xlu0 %669, %v599
  %v671 = vpop.permute.xlu0 %670
  %672 = vset.pattern.permute.xlu0 0
  %673 = vperm.xlu0 %672, %v600
  %v674 = vpop.permute.xlu0 %673
  %675 = vset.pattern.permute.xlu0 0
  %676 = vperm.xlu0 %675, %v601
  %v677 = vpop.permute.xlu0 %676
  %678 = vset.pattern.permute.xlu0 0
  %679 = vperm.xlu0 %678, %v602
  %v680 = vpop.permute.xlu0 %679
  %681 = vset.pattern.permute.xlu0 0
  %682 = vperm.xlu0 %681, %v603
  %v683 = vpop.permute.xlu0 %682
  %684 = vset.pattern.permute.xlu0 0
  %685 = vperm.xlu0 %684, %v604
  %v686 = vpop.permute.xlu0 %685
  %687 = vset.pattern.permute.xlu0 0
  %688 = vperm.xlu0 %687, %v605
  %v689 = vpop.permute.xlu0 %688
  %690 = vset.pattern.permute.xlu0 0
  %691 = vperm.xlu0 %690, %v606
  %v692 = vpop.permute.xlu0 %691
  %693 = vset.pattern.permute.xlu0 0
  %694 = vperm.xlu0 %693, %v607
  %v695 = vpop.permute.xlu0 %694
  %696 = vset.pattern.permute.xlu0 0
  %697 = vperm.xlu0 %696, %v608
  %v698 = vpop.permute.xlu0 %697
  %699 = vset.pattern.permute.xlu0 0
  %700 = vperm.xlu0 %699, %v609
  %v701 = vpop.permute.xlu0 %700
  %702 = vset.pattern.permute.xlu0 0
  %703 = vperm.xlu0 %702, %v610
  %v704 = vpop.permute.xlu0 %703
  %705 = vset.pattern.permute.xlu0 0
  %706 = vperm.xlu0 %705, %v611
  %v707 = vpop.permute.xlu0 %706
  %708 = vset.pattern.permute.xlu0 0
  %709 = vperm.xlu0 %708, %v612
  %v710 = vpop.permute.xlu0 %709
  %711 = vset.pattern.permute.xlu0 0
  %712 = vperm.xlu0 %711, %v613
  %v713 = vpop.permute.xlu0 %712
  %714 = vset.pattern.permute.xlu0 0
  %715 = vperm.xlu0 %714, %v614
  %v716 = vpop.permute.xlu0 %715
  %717 = vset.pattern.permute.xlu0 0
  %718 = vperm.xlu0 %717, %v615
  %v719 = vpop.permute.xlu0 %718
  %720 = vset.pattern.permute.xlu0 0
  %721 = vperm.xlu0 %720, %v616
  %v722 = vpop.permute.xlu0 %721
  %723 = vset.pattern.permute.xlu0 0
  %724 = vperm.xlu0 %723, %v617
  %v725 = vpop.permute.xlu0 %724
  %726 = vset.pattern.permute.xlu0 0
  %727 = vperm.xlu0 %726, %v618
  %v728 = vpop.permute.xlu0 %727
  %729 = vset.pattern.permute.xlu0 0
  %730 = vperm.xlu0 %729, %v619
  %v731 = vpop.permute.xlu0 %730
  %732 = vset.pattern.permute.xlu0 0
  %733 = vperm.xlu0 %732, %v620
  %v734 = vpop.permute.xlu0 %733
  %735 = vset.pattern.permute.xlu0 0
  %736 = vperm.xlu0 %735, %v621
  %v737 = vpop.permute.xlu0 %736
  %738 = vset.pattern.permute.xlu0 0
  %739 = vperm.xlu0 %738, %v622
  %v740 = vpop.permute.xlu0 %739
  %741 = vset.pattern.permute.xlu0 0
  %742 = vperm.xlu0 %741, %v623
  %v743 = vpop.permute.xlu0 %742
  %744 = vset.pattern.permute.xlu0 0
  %745 = vperm.xlu0 %744, %v624
  %v746 = vpop.permute.xlu0 %745
  %747 = vset.pattern.permute.xlu0 0
  %748 = vperm.xlu0 %747, %v625
  %v749 = vpop.permute.xlu0 %748
  %750 = vset.pattern.permute.xlu0 0
  %751 = vperm.xlu0 %750, %v626
  %v752 = vpop.permute.xlu0 %751
  %753 = vset.pattern.permute.xlu0 0
  %754 = vperm.xlu0 %753, %v627
  %v755 = vpop.permute.xlu0 %754
  %v756 = vlaneseq
  %v757 = vshrl.u32 %v756, 7
  %v758 = vsub.s32 %v311, %v757
  %v759 = vrot.slane %v662, %v758
  %v760 = vlaneseq
  %v761 = vshrl.u32 %v760, 7
  %v762 = vsub.s32 %v316, %v761
  %v763 = vrot.slane %v665, %v762
  %v764 = vsel %vm321, %v763, %v759
  %v765 = vlaneseq
  %v766 = vshrl.u32 %v765, 7
  %v767 = vsub.s32 %v323, %v766
  %v768 = vrot.slane %v668, %v767
  %v769 = vsel %vm328, %v768, %v764
  %v770 = vlaneseq
  %v771 = vshrl.u32 %v770, 7
  %v772 = vsub.s32 %v330, %v771
  %v773 = vrot.slane %v671, %v772
  %v774 = vsel %vm335, %v773, %v769
  %v775 = vlaneseq
  %v776 = vshrl.u32 %v775, 7
  %v777 = vsub.s32 %v337, %v776
  %v778 = vrot.slane %v674, %v777
  %v779 = vsel %vm342, %v778, %v774
  %v780 = vlaneseq
  %v781 = vshrl.u32 %v780, 7
  %v782 = vsub.s32 %v344, %v781
  %v783 = vrot.slane %v677, %v782
  %v784 = vsel %vm349, %v783, %v779
  %v785 = vlaneseq
  %v786 = vshrl.u32 %v785, 7
  %v787 = vsub.s32 %v351, %v786
  %v788 = vrot.slane %v680, %v787
  %v789 = vsel %vm356, %v788, %v784
  %v790 = vlaneseq
  %v791 = vshrl.u32 %v790, 7
  %v792 = vsub.s32 %v358, %v791
  %v793 = vrot.slane %v683, %v792
  %v794 = vsel %vm363, %v793, %v789
  %v795 = vlaneseq
  %v796 = vshrl.u32 %v795, 7
  %v797 = vsub.s32 %v365, %v796
  %v798 = vrot.slane %v686, %v797
  %v799 = vsel %vm370, %v798, %v794
  %v800 = vlaneseq
  %v801 = vshrl.u32 %v800, 7
  %v802 = vsub.s32 %v372, %v801
  %v803 = vrot.slane %v689, %v802
  %v804 = vsel %vm377, %v803, %v799
  %v805 = vlaneseq
  %v806 = vshrl.u32 %v805, 7
  %v807 = vsub.s32 %v379, %v806
  %v808 = vrot.slane %v692, %v807
  %v809 = vsel %vm384, %v808, %v804
  %v810 = vlaneseq
  %v811 = vshrl.u32 %v810, 7
  %v812 = vsub.s32 %v386, %v811
  %v813 = vrot.slane %v695, %v812
  %v814 = vsel %vm391, %v813, %v809
  %v815 = vlaneseq
  %v816 = vshrl.u32 %v815, 7
  %v817 = vsub.s32 %v393, %v816
  %v818 = vrot.slane %v698, %v817
  %v819 = vsel %vm398, %v818, %v814
  %v820 = vlaneseq
  %v821 = vshrl.u32 %v820, 7
  %v822 = vsub.s32 %v400, %v821
  %v823 = vrot.slane %v701, %v822
  %v824 = vsel %vm405, %v823, %v819
  %v825 = vlaneseq
  %v826 = vshrl.u32 %v825, 7
  %v827 = vsub.s32 %v407, %v826
  %v828 = vrot.slane %v704, %v827
  %v829 = vsel %vm412, %v828, %v824
  %v830 = vlaneseq
  %v831 = vshrl.u32 %v830, 7
  %v832 = vsub.s32 %v414, %v831
  %v833 = vrot.slane %v707, %v832
  %v834 = vsel %vm419, %v833, %v829
  %v835 = vlaneseq
  %v836 = vshrl.u32 %v835, 7
  %v837 = vsub.s32 %v311, %v836
  %v838 = vrot.slane %v710, %v837
  %v839 = vlaneseq
  %v840 = vshrl.u32 %v839, 7
  %v841 = vsub.s32 %v316, %v840
  %v842 = vrot.slane %v713, %v841
  %v843 = vsel %vm321, %v842, %v838
  %v844 = vlaneseq
  %v845 = vshrl.u32 %v844, 7
  %v846 = vsub.s32 %v323, %v845
  %v847 = vrot.slane %v716, %v846
  %v848 = vsel %vm328, %v847, %v843
  %v849 = vlaneseq
  %v850 = vshrl.u32 %v849, 7
  %v851 = vsub.s32 %v330, %v850
  %v852 = vrot.slane %v719, %v851
  %v853 = vsel %vm335, %v852, %v848
  %v854 = vlaneseq
  %v855 = vshrl.u32 %v854, 7
  %v856 = vsub.s32 %v337, %v855
  %v857 = vrot.slane %v722, %v856
  %v858 = vsel %vm342, %v857, %v853
  %v859 = vlaneseq
  %v860 = vshrl.u32 %v859, 7
  %v861 = vsub.s32 %v344, %v860
  %v862 = vrot.slane %v725, %v861
  %v863 = vsel %vm349, %v862, %v858
  %v864 = vlaneseq
  %v865 = vshrl.u32 %v864, 7
  %v866 = vsub.s32 %v351, %v865
  %v867 = vrot.slane %v728, %v866
  %v868 = vsel %vm356, %v867, %v863
  %v869 = vlaneseq
  %v870 = vshrl.u32 %v869, 7
  %v871 = vsub.s32 %v358, %v870
  %v872 = vrot.slane %v731, %v871
  %v873 = vsel %vm363, %v872, %v868
  %v874 = vlaneseq
  %v875 = vshrl.u32 %v874, 7
  %v876 = vsub.s32 %v365, %v875
  %v877 = vrot.slane %v734, %v876
  %v878 = vsel %vm370, %v877, %v873
  %v879 = vlaneseq
  %v880 = vshrl.u32 %v879, 7
  %v881 = vsub.s32 %v372, %v880
  %v882 = vrot.slane %v737, %v881
  %v883 = vsel %vm377, %v882, %v878
  %v884 = vlaneseq
  %v885 = vshrl.u32 %v884, 7
  %v886 = vsub.s32 %v379, %v885
  %v887 = vrot.slane %v740, %v886
  %v888 = vsel %vm384, %v887, %v883
  %v889 = vlaneseq
  %v890 = vshrl.u32 %v889, 7
  %v891 = vsub.s32 %v386, %v890
  %v892 = vrot.slane %v743, %v891
  %v893 = vsel %vm391, %v892, %v888
  %v894 = vlaneseq
  %v895 = vshrl.u32 %v894, 7
  %v896 = vsub.s32 %v393, %v895
  %v897 = vrot.slane %v746, %v896
  %v898 = vsel %vm398, %v897, %v893
  %v899 = vlaneseq
  %v900 = vshrl.u32 %v899, 7
  %v901 = vsub.s32 %v400, %v900
  %v902 = vrot.slane %v749, %v901
  %v903 = vsel %vm405, %v902, %v898
  %v904 = vlaneseq
  %v905 = vshrl.u32 %v904, 7
  %v906 = vsub.s32 %v407, %v905
  %v907 = vrot.slane %v752, %v906
  %v908 = vsel %vm412, %v907, %v903
  %v909 = vlaneseq
  %v910 = vshrl.u32 %v909, 7
  %v911 = vsub.s32 %v414, %v910
  %v912 = vrot.slane %v755, %v911
  %v913 = vsel %vm419, %v912, %v908
  %v914 = vsel %vm500, %v913, %v834
  %v916 = vadd.f32 %v503, %v914
  %v917 = vlaneseq
  %v918 = vshrl.u32 %v917, 7
  %v919 = vsub.s32 2, %v918
  %v920 = vrot.slane %v37, %v919
  %v921 = vlaneseq
  %v922 = vshrl.u32 %v921, 7
  %v923 = vsub.s32 2, %v922
  %v924 = vrot.slane %v38, %v923
  %v925 = vlaneseq
  %v926 = vshrl.u32 %v925, 7
  %v927 = vsub.s32 2, %v926
  %v928 = vrot.slane %v47, %v927
  %931 = vbcast.lane.b32.xlu0 %v928, 256
  %v932 = vpop.permute.xlu0 %931
  %s934 = sor.u32 256, 8
  %935 = vbcast.lane.b32.xlu0 %v928, %s934
  %v936 = vpop.permute.xlu0 %935
  %s938 = sor.u32 256, 16
  %939 = vbcast.lane.b32.xlu0 %v928, %s938
  %v940 = vpop.permute.xlu0 %939
  %s942 = sor.u32 256, 24
  %943 = vbcast.lane.b32.xlu0 %v928, %s942
  %v944 = vpop.permute.xlu0 %943
  %s946 = sor.u32 256, 32
  %947 = vbcast.lane.b32.xlu0 %v928, %s946
  %v948 = vpop.permute.xlu0 %947
  %s950 = sor.u32 256, 40
  %951 = vbcast.lane.b32.xlu0 %v928, %s950
  %v952 = vpop.permute.xlu0 %951
  %s954 = sor.u32 256, 48
  %955 = vbcast.lane.b32.xlu0 %v928, %s954
  %v956 = vpop.permute.xlu0 %955
  %s958 = sor.u32 256, 56
  %959 = vbcast.lane.b32.xlu0 %v928, %s958
  %v960 = vpop.permute.xlu0 %959
  %s962 = sor.u32 256, 64
  %963 = vbcast.lane.b32.xlu0 %v928, %s962
  %v964 = vpop.permute.xlu0 %963
  %s966 = sor.u32 256, 72
  %967 = vbcast.lane.b32.xlu0 %v928, %s966
  %v968 = vpop.permute.xlu0 %967
  %s970 = sor.u32 256, 80
  %971 = vbcast.lane.b32.xlu0 %v928, %s970
  %v972 = vpop.permute.xlu0 %971
  %s974 = sor.u32 256, 88
  %975 = vbcast.lane.b32.xlu0 %v928, %s974
  %v976 = vpop.permute.xlu0 %975
  %s978 = sor.u32 256, 96
  %979 = vbcast.lane.b32.xlu0 %v928, %s978
  %v980 = vpop.permute.xlu0 %979
  %s982 = sor.u32 256, 104
  %983 = vbcast.lane.b32.xlu0 %v928, %s982
  %v984 = vpop.permute.xlu0 %983
  %s986 = sor.u32 256, 112
  %987 = vbcast.lane.b32.xlu0 %v928, %s986
  %v988 = vpop.permute.xlu0 %987
  %s990 = sor.u32 256, 120
  %991 = vbcast.lane.b32.xlu0 %v928, %s990
  %v992 = vpop.permute.xlu0 %991
  %v1009 = vmul.f32 %v920, %v932
  %v1010 = vmul.f32 %v920, %v936
  %v1011 = vmul.f32 %v920, %v940
  %v1012 = vmul.f32 %v920, %v944
  %v1013 = vmul.f32 %v920, %v948
  %v1014 = vmul.f32 %v920, %v952
  %v1015 = vmul.f32 %v920, %v956
  %v1016 = vmul.f32 %v920, %v960
  %v1017 = vmul.f32 %v920, %v964
  %v1018 = vmul.f32 %v920, %v968
  %v1019 = vmul.f32 %v920, %v972
  %v1020 = vmul.f32 %v920, %v976
  %v1021 = vmul.f32 %v920, %v980
  %v1022 = vmul.f32 %v920, %v984
  %v1023 = vmul.f32 %v920, %v988
  %v1024 = vmul.f32 %v920, %v992
  %v1025 = vmul.f32 %v924, %v932
  %v1026 = vmul.f32 %v924, %v936
  %v1027 = vmul.f32 %v924, %v940
  %v1028 = vmul.f32 %v924, %v944
  %v1029 = vmul.f32 %v924, %v948
  %v1030 = vmul.f32 %v924, %v952
  %v1031 = vmul.f32 %v924, %v956
  %v1032 = vmul.f32 %v924, %v960
  %v1033 = vmul.f32 %v924, %v964
  %v1034 = vmul.f32 %v924, %v968
  %v1035 = vmul.f32 %v924, %v972
  %v1036 = vmul.f32 %v924, %v976
  %v1037 = vmul.f32 %v924, %v980
  %v1038 = vmul.f32 %v924, %v984
  %v1039 = vmul.f32 %v924, %v988
  %v1040 = vmul.f32 %v924, %v992
  %1073 = vset.pattern.permute.xlu0 0
  %1074 = vperm.xlu0 %1073, %v1009
  %v1075 = vpop.permute.xlu0 %1074
  %1076 = vset.pattern.permute.xlu0 0
  %1077 = vperm.xlu0 %1076, %v1010
  %v1078 = vpop.permute.xlu0 %1077
  %1079 = vset.pattern.permute.xlu0 0
  %1080 = vperm.xlu0 %1079, %v1011
  %v1081 = vpop.permute.xlu0 %1080
  %1082 = vset.pattern.permute.xlu0 0
  %1083 = vperm.xlu0 %1082, %v1012
  %v1084 = vpop.permute.xlu0 %1083
  %1085 = vset.pattern.permute.xlu0 0
  %1086 = vperm.xlu0 %1085, %v1013
  %v1087 = vpop.permute.xlu0 %1086
  %1088 = vset.pattern.permute.xlu0 0
  %1089 = vperm.xlu0 %1088, %v1014
  %v1090 = vpop.permute.xlu0 %1089
  %1091 = vset.pattern.permute.xlu0 0
  %1092 = vperm.xlu0 %1091, %v1015
  %v1093 = vpop.permute.xlu0 %1092
  %1094 = vset.pattern.permute.xlu0 0
  %1095 = vperm.xlu0 %1094, %v1016
  %v1096 = vpop.permute.xlu0 %1095
  %1097 = vset.pattern.permute.xlu0 0
  %1098 = vperm.xlu0 %1097, %v1017
  %v1099 = vpop.permute.xlu0 %1098
  %1100 = vset.pattern.permute.xlu0 0
  %1101 = vperm.xlu0 %1100, %v1018
  %v1102 = vpop.permute.xlu0 %1101
  %1103 = vset.pattern.permute.xlu0 0
  %1104 = vperm.xlu0 %1103, %v1019
  %v1105 = vpop.permute.xlu0 %1104
  %1106 = vset.pattern.permute.xlu0 0
  %1107 = vperm.xlu0 %1106, %v1020
  %v1108 = vpop.permute.xlu0 %1107
  %1109 = vset.pattern.permute.xlu0 0
  %1110 = vperm.xlu0 %1109, %v1021
  %v1111 = vpop.permute.xlu0 %1110
  %1112 = vset.pattern.permute.xlu0 0
  %1113 = vperm.xlu0 %1112, %v1022
  %v1114 = vpop.permute.xlu0 %1113
  %1115 = vset.pattern.permute.xlu0 0
  %1116 = vperm.xlu0 %1115, %v1023
  %v1117 = vpop.permute.xlu0 %1116
  %1118 = vset.pattern.permute.xlu0 0
  %1119 = vperm.xlu0 %1118, %v1024
  %v1120 = vpop.permute.xlu0 %1119
  %1121 = vset.pattern.permute.xlu0 0
  %1122 = vperm.xlu0 %1121, %v1025
  %v1123 = vpop.permute.xlu0 %1122
  %1124 = vset.pattern.permute.xlu0 0
  %1125 = vperm.xlu0 %1124, %v1026
  %v1126 = vpop.permute.xlu0 %1125
  %1127 = vset.pattern.permute.xlu0 0
  %1128 = vperm.xlu0 %1127, %v1027
  %v1129 = vpop.permute.xlu0 %1128
  %1130 = vset.pattern.permute.xlu0 0
  %1131 = vperm.xlu0 %1130, %v1028
  %v1132 = vpop.permute.xlu0 %1131
  %1133 = vset.pattern.permute.xlu0 0
  %1134 = vperm.xlu0 %1133, %v1029
  %v1135 = vpop.permute.xlu0 %1134
  %1136 = vset.pattern.permute.xlu0 0
  %1137 = vperm.xlu0 %1136, %v1030
  %v1138 = vpop.permute.xlu0 %1137
  %1139 = vset.pattern.permute.xlu0 0
  %1140 = vperm.xlu0 %1139, %v1031
  %v1141 = vpop.permute.xlu0 %1140
  %1142 = vset.pattern.permute.xlu0 0
  %1143 = vperm.xlu0 %1142, %v1032
  %v1144 = vpop.permute.xlu0 %1143
  %1145 = vset.pattern.permute.xlu0 0
  %1146 = vperm.xlu0 %1145, %v1033
  %v1147 = vpop.permute.xlu0 %1146
  %1148 = vset.pattern.permute.xlu0 0
  %1149 = vperm.xlu0 %1148, %v1034
  %v1150 = vpop.permute.xlu0 %1149
  %1151 = vset.pattern.permute.xlu0 0
  %1152 = vperm.xlu0 %1151, %v1035
  %v1153 = vpop.permute.xlu0 %1152
  %1154 = vset.pattern.permute.xlu0 0
  %1155 = vperm.xlu0 %1154, %v1036
  %v1156 = vpop.permute.xlu0 %1155
  %1157 = vset.pattern.permute.xlu0 0
  %1158 = vperm.xlu0 %1157, %v1037
  %v1159 = vpop.permute.xlu0 %1158
  %1160 = vset.pattern.permute.xlu0 0
  %1161 = vperm.xlu0 %1160, %v1038
  %v1162 = vpop.permute.xlu0 %1161
  %1163 = vset.pattern.permute.xlu0 0
  %1164 = vperm.xlu0 %1163, %v1039
  %v1165 = vpop.permute.xlu0 %1164
  %1166 = vset.pattern.permute.xlu0 0
  %1167 = vperm.xlu0 %1166, %v1040
  %v1168 = vpop.permute.xlu0 %1167
  %v1169 = vlaneseq
  %v1170 = vshrl.u32 %v1169, 7
  %v1171 = vsub.s32 %v311, %v1170
  %v1172 = vrot.slane %v1075, %v1171
  %v1173 = vlaneseq
  %v1174 = vshrl.u32 %v1173, 7
  %v1175 = vsub.s32 %v316, %v1174
  %v1176 = vrot.slane %v1078, %v1175
  %v1177 = vsel %vm321, %v1176, %v1172
  %v1178 = vlaneseq
  %v1179 = vshrl.u32 %v1178, 7
  %v1180 = vsub.s32 %v323, %v1179
  %v1181 = vrot.slane %v1081, %v1180
  %v1182 = vsel %vm328, %v1181, %v1177
  %v1183 = vlaneseq
  %v1184 = vshrl.u32 %v1183, 7
  %v1185 = vsub.s32 %v330, %v1184
  %v1186 = vrot.slane %v1084, %v1185
  %v1187 = vsel %vm335, %v1186, %v1182
  %v1188 = vlaneseq
  %v1189 = vshrl.u32 %v1188, 7
  %v1190 = vsub.s32 %v337, %v1189
  %v1191 = vrot.slane %v1087, %v1190
  %v1192 = vsel %vm342, %v1191, %v1187
  %v1193 = vlaneseq
  %v1194 = vshrl.u32 %v1193, 7
  %v1195 = vsub.s32 %v344, %v1194
  %v1196 = vrot.slane %v1090, %v1195
  %v1197 = vsel %vm349, %v1196, %v1192
  %v1198 = vlaneseq
  %v1199 = vshrl.u32 %v1198, 7
  %v1200 = vsub.s32 %v351, %v1199
  %v1201 = vrot.slane %v1093, %v1200
  %v1202 = vsel %vm356, %v1201, %v1197
  %v1203 = vlaneseq
  %v1204 = vshrl.u32 %v1203, 7
  %v1205 = vsub.s32 %v358, %v1204
  %v1206 = vrot.slane %v1096, %v1205
  %v1207 = vsel %vm363, %v1206, %v1202
  %v1208 = vlaneseq
  %v1209 = vshrl.u32 %v1208, 7
  %v1210 = vsub.s32 %v365, %v1209
  %v1211 = vrot.slane %v1099, %v1210
  %v1212 = vsel %vm370, %v1211, %v1207
  %v1213 = vlaneseq
  %v1214 = vshrl.u32 %v1213, 7
  %v1215 = vsub.s32 %v372, %v1214
  %v1216 = vrot.slane %v1102, %v1215
  %v1217 = vsel %vm377, %v1216, %v1212
  %v1218 = vlaneseq
  %v1219 = vshrl.u32 %v1218, 7
  %v1220 = vsub.s32 %v379, %v1219
  %v1221 = vrot.slane %v1105, %v1220
  %v1222 = vsel %vm384, %v1221, %v1217
  %v1223 = vlaneseq
  %v1224 = vshrl.u32 %v1223, 7
  %v1225 = vsub.s32 %v386, %v1224
  %v1226 = vrot.slane %v1108, %v1225
  %v1227 = vsel %vm391, %v1226, %v1222
  %v1228 = vlaneseq
  %v1229 = vshrl.u32 %v1228, 7
  %v1230 = vsub.s32 %v393, %v1229
  %v1231 = vrot.slane %v1111, %v1230
  %v1232 = vsel %vm398, %v1231, %v1227
  %v1233 = vlaneseq
  %v1234 = vshrl.u32 %v1233, 7
  %v1235 = vsub.s32 %v400, %v1234
  %v1236 = vrot.slane %v1114, %v1235
  %v1237 = vsel %vm405, %v1236, %v1232
  %v1238 = vlaneseq
  %v1239 = vshrl.u32 %v1238, 7
  %v1240 = vsub.s32 %v407, %v1239
  %v1241 = vrot.slane %v1117, %v1240
  %v1242 = vsel %vm412, %v1241, %v1237
  %v1243 = vlaneseq
  %v1244 = vshrl.u32 %v1243, 7
  %v1245 = vsub.s32 %v414, %v1244
  %v1246 = vrot.slane %v1120, %v1245
  %v1247 = vsel %vm419, %v1246, %v1242
  %v1248 = vlaneseq
  %v1249 = vshrl.u32 %v1248, 7
  %v1250 = vsub.s32 %v311, %v1249
  %v1251 = vrot.slane %v1123, %v1250
  %v1252 = vlaneseq
  %v1253 = vshrl.u32 %v1252, 7
  %v1254 = vsub.s32 %v316, %v1253
  %v1255 = vrot.slane %v1126, %v1254
  %v1256 = vsel %vm321, %v1255, %v1251
  %v1257 = vlaneseq
  %v1258 = vshrl.u32 %v1257, 7
  %v1259 = vsub.s32 %v323, %v1258
  %v1260 = vrot.slane %v1129, %v1259
  %v1261 = vsel %vm328, %v1260, %v1256
  %v1262 = vlaneseq
  %v1263 = vshrl.u32 %v1262, 7
  %v1264 = vsub.s32 %v330, %v1263
  %v1265 = vrot.slane %v1132, %v1264
  %v1266 = vsel %vm335, %v1265, %v1261
  %v1267 = vlaneseq
  %v1268 = vshrl.u32 %v1267, 7
  %v1269 = vsub.s32 %v337, %v1268
  %v1270 = vrot.slane %v1135, %v1269
  %v1271 = vsel %vm342, %v1270, %v1266
  %v1272 = vlaneseq
  %v1273 = vshrl.u32 %v1272, 7
  %v1274 = vsub.s32 %v344, %v1273
  %v1275 = vrot.slane %v1138, %v1274
  %v1276 = vsel %vm349, %v1275, %v1271
  %v1277 = vlaneseq
  %v1278 = vshrl.u32 %v1277, 7
  %v1279 = vsub.s32 %v351, %v1278
  %v1280 = vrot.slane %v1141, %v1279
  %v1281 = vsel %vm356, %v1280, %v1276
  %v1282 = vlaneseq
  %v1283 = vshrl.u32 %v1282, 7
  %v1284 = vsub.s32 %v358, %v1283
  %v1285 = vrot.slane %v1144, %v1284
  %v1286 = vsel %vm363, %v1285, %v1281
  %v1287 = vlaneseq
  %v1288 = vshrl.u32 %v1287, 7
  %v1289 = vsub.s32 %v365, %v1288
  %v1290 = vrot.slane %v1147, %v1289
  %v1291 = vsel %vm370, %v1290, %v1286
  %v1292 = vlaneseq
  %v1293 = vshrl.u32 %v1292, 7
  %v1294 = vsub.s32 %v372, %v1293
  %v1295 = vrot.slane %v1150, %v1294
  %v1296 = vsel %vm377, %v1295, %v1291
  %v1297 = vlaneseq
  %v1298 = vshrl.u32 %v1297, 7
  %v1299 = vsub.s32 %v379, %v1298
  %v1300 = vrot.slane %v1153, %v1299
  %v1301 = vsel %vm384, %v1300, %v1296
  %v1302 = vlaneseq
  %v1303 = vshrl.u32 %v1302, 7
  %v1304 = vsub.s32 %v386, %v1303
  %v1305 = vrot.slane %v1156, %v1304
  %v1306 = vsel %vm391, %v1305, %v1301
  %v1307 = vlaneseq
  %v1308 = vshrl.u32 %v1307, 7
  %v1309 = vsub.s32 %v393, %v1308
  %v1310 = vrot.slane %v1159, %v1309
  %v1311 = vsel %vm398, %v1310, %v1306
  %v1312 = vlaneseq
  %v1313 = vshrl.u32 %v1312, 7
  %v1314 = vsub.s32 %v400, %v1313
  %v1315 = vrot.slane %v1162, %v1314
  %v1316 = vsel %vm405, %v1315, %v1311
  %v1317 = vlaneseq
  %v1318 = vshrl.u32 %v1317, 7
  %v1319 = vsub.s32 %v407, %v1318
  %v1320 = vrot.slane %v1165, %v1319
  %v1321 = vsel %vm412, %v1320, %v1316
  %v1322 = vlaneseq
  %v1323 = vshrl.u32 %v1322, 7
  %v1324 = vsub.s32 %v414, %v1323
  %v1325 = vrot.slane %v1168, %v1324
  %v1326 = vsel %vm419, %v1325, %v1321
  %v1327 = vsel %vm500, %v1326, %v1247
  %v1329 = vadd.f32 %v916, %v1327
  %v1330 = vlaneseq
  %v1331 = vshrl.u32 %v1330, 7
  %v1332 = vsub.s32 3, %v1331
  %v1333 = vrot.slane %v37, %v1332
  %v1334 = vlaneseq
  %v1335 = vshrl.u32 %v1334, 7
  %v1336 = vsub.s32 3, %v1335
  %v1337 = vrot.slane %v38, %v1336
  %v1338 = vlaneseq
  %v1339 = vshrl.u32 %v1338, 7
  %v1340 = vsub.s32 3, %v1339
  %v1341 = vrot.slane %v47, %v1340
  %1344 = vbcast.lane.b32.xlu0 %v1341, 256
  %v1345 = vpop.permute.xlu0 %1344
  %s1347 = sor.u32 256, 8
  %1348 = vbcast.lane.b32.xlu0 %v1341, %s1347
  %v1349 = vpop.permute.xlu0 %1348
  %s1351 = sor.u32 256, 16
  %1352 = vbcast.lane.b32.xlu0 %v1341, %s1351
  %v1353 = vpop.permute.xlu0 %1352
  %s1355 = sor.u32 256, 24
  %1356 = vbcast.lane.b32.xlu0 %v1341, %s1355
  %v1357 = vpop.permute.xlu0 %1356
  %s1359 = sor.u32 256, 32
  %1360 = vbcast.lane.b32.xlu0 %v1341, %s1359
  %v1361 = vpop.permute.xlu0 %1360
  %s1363 = sor.u32 256, 40
  %1364 = vbcast.lane.b32.xlu0 %v1341, %s1363
  %v1365 = vpop.permute.xlu0 %1364
  %s1367 = sor.u32 256, 48
  %1368 = vbcast.lane.b32.xlu0 %v1341, %s1367
  %v1369 = vpop.permute.xlu0 %1368
  %s1371 = sor.u32 256, 56
  %1372 = vbcast.lane.b32.xlu0 %v1341, %s1371
  %v1373 = vpop.permute.xlu0 %1372
  %s1375 = sor.u32 256, 64
  %1376 = vbcast.lane.b32.xlu0 %v1341, %s1375
  %v1377 = vpop.permute.xlu0 %1376
  %s1379 = sor.u32 256, 72
  %1380 = vbcast.lane.b32.xlu0 %v1341, %s1379
  %v1381 = vpop.permute.xlu0 %1380
  %s1383 = sor.u32 256, 80
  %1384 = vbcast.lane.b32.xlu0 %v1341, %s1383
  %v1385 = vpop.permute.xlu0 %1384
  %s1387 = sor.u32 256, 88
  %1388 = vbcast.lane.b32.xlu0 %v1341, %s1387
  %v1389 = vpop.permute.xlu0 %1388
  %s1391 = sor.u32 256, 96
  %1392 = vbcast.lane.b32.xlu0 %v1341, %s1391
  %v1393 = vpop.permute.xlu0 %1392
  %s1395 = sor.u32 256, 104
  %1396 = vbcast.lane.b32.xlu0 %v1341, %s1395
  %v1397 = vpop.permute.xlu0 %1396
  %s1399 = sor.u32 256, 112
  %1400 = vbcast.lane.b32.xlu0 %v1341, %s1399
  %v1401 = vpop.permute.xlu0 %1400
  %s1403 = sor.u32 256, 120
  %1404 = vbcast.lane.b32.xlu0 %v1341, %s1403
  %v1405 = vpop.permute.xlu0 %1404
  %v1422 = vmul.f32 %v1333, %v1345
  %v1423 = vmul.f32 %v1333, %v1349
  %v1424 = vmul.f32 %v1333, %v1353
  %v1425 = vmul.f32 %v1333, %v1357
  %v1426 = vmul.f32 %v1333, %v1361
  %v1427 = vmul.f32 %v1333, %v1365
  %v1428 = vmul.f32 %v1333, %v1369
  %v1429 = vmul.f32 %v1333, %v1373
  %v1430 = vmul.f32 %v1333, %v1377
  %v1431 = vmul.f32 %v1333, %v1381
  %v1432 = vmul.f32 %v1333, %v1385
  %v1433 = vmul.f32 %v1333, %v1389
  %v1434 = vmul.f32 %v1333, %v1393
  %v1435 = vmul.f32 %v1333, %v1397
  %v1436 = vmul.f32 %v1333, %v1401
  %v1437 = vmul.f32 %v1333, %v1405
  %v1438 = vmul.f32 %v1337, %v1345
  %v1439 = vmul.f32 %v1337, %v1349
  %v1440 = vmul.f32 %v1337, %v1353
  %v1441 = vmul.f32 %v1337, %v1357
  %v1442 = vmul.f32 %v1337, %v1361
  %v1443 = vmul.f32 %v1337, %v1365
  %v1444 = vmul.f32 %v1337, %v1369
  %v1445 = vmul.f32 %v1337, %v1373
  %v1446 = vmul.f32 %v1337, %v1377
  %v1447 = vmul.f32 %v1337, %v1381
  %v1448 = vmul.f32 %v1337, %v1385
  %v1449 = vmul.f32 %v1337, %v1389
  %v1450 = vmul.f32 %v1337, %v1393
  %v1451 = vmul.f32 %v1337, %v1397
  %v1452 = vmul.f32 %v1337, %v1401
  %v1453 = vmul.f32 %v1337, %v1405
  %1486 = vset.pattern.permute.xlu0 0
  %1487 = vperm.xlu0 %1486, %v1422
  %v1488 = vpop.permute.xlu0 %1487
  %1489 = vset.pattern.permute.xlu0 0
  %1490 = vperm.xlu0 %1489, %v1423
  %v1491 = vpop.permute.xlu0 %1490
  %1492 = vset.pattern.permute.xlu0 0
  %1493 = vperm.xlu0 %1492, %v1424
  %v1494 = vpop.permute.xlu0 %1493
  %1495 = vset.pattern.permute.xlu0 0
  %1496 = vperm.xlu0 %1495, %v1425
  %v1497 = vpop.permute.xlu0 %1496
  %1498 = vset.pattern.permute.xlu0 0
  %1499 = vperm.xlu0 %1498, %v1426
  %v1500 = vpop.permute.xlu0 %1499
  %1501 = vset.pattern.permute.xlu0 0
  %1502 = vperm.xlu0 %1501, %v1427
  %v1503 = vpop.permute.xlu0 %1502
  %1504 = vset.pattern.permute.xlu0 0
  %1505 = vperm.xlu0 %1504, %v1428
  %v1506 = vpop.permute.xlu0 %1505
  %1507 = vset.pattern.permute.xlu0 0
  %1508 = vperm.xlu0 %1507, %v1429
  %v1509 = vpop.permute.xlu0 %1508
  %1510 = vset.pattern.permute.xlu0 0
  %1511 = vperm.xlu0 %1510, %v1430
  %v1512 = vpop.permute.xlu0 %1511
  %1513 = vset.pattern.permute.xlu0 0
  %1514 = vperm.xlu0 %1513, %v1431
  %v1515 = vpop.permute.xlu0 %1514
  %1516 = vset.pattern.permute.xlu0 0
  %1517 = vperm.xlu0 %1516, %v1432
  %v1518 = vpop.permute.xlu0 %1517
  %1519 = vset.pattern.permute.xlu0 0
  %1520 = vperm.xlu0 %1519, %v1433
  %v1521 = vpop.permute.xlu0 %1520
  %1522 = vset.pattern.permute.xlu0 0
  %1523 = vperm.xlu0 %1522, %v1434
  %v1524 = vpop.permute.xlu0 %1523
  %1525 = vset.pattern.permute.xlu0 0
  %1526 = vperm.xlu0 %1525, %v1435
  %v1527 = vpop.permute.xlu0 %1526
  %1528 = vset.pattern.permute.xlu0 0
  %1529 = vperm.xlu0 %1528, %v1436
  %v1530 = vpop.permute.xlu0 %1529
  %1531 = vset.pattern.permute.xlu0 0
  %1532 = vperm.xlu0 %1531, %v1437
  %v1533 = vpop.permute.xlu0 %1532
  %1534 = vset.pattern.permute.xlu0 0
  %1535 = vperm.xlu0 %1534, %v1438
  %v1536 = vpop.permute.xlu0 %1535
  %1537 = vset.pattern.permute.xlu0 0
  %1538 = vperm.xlu0 %1537, %v1439
  %v1539 = vpop.permute.xlu0 %1538
  %1540 = vset.pattern.permute.xlu0 0
  %1541 = vperm.xlu0 %1540, %v1440
  %v1542 = vpop.permute.xlu0 %1541
  %1543 = vset.pattern.permute.xlu0 0
  %1544 = vperm.xlu0 %1543, %v1441
  %v1545 = vpop.permute.xlu0 %1544
  %1546 = vset.pattern.permute.xlu0 0
  %1547 = vperm.xlu0 %1546, %v1442
  %v1548 = vpop.permute.xlu0 %1547
  %1549 = vset.pattern.permute.xlu0 0
  %1550 = vperm.xlu0 %1549, %v1443
  %v1551 = vpop.permute.xlu0 %1550
  %1552 = vset.pattern.permute.xlu0 0
  %1553 = vperm.xlu0 %1552, %v1444
  %v1554 = vpop.permute.xlu0 %1553
  %1555 = vset.pattern.permute.xlu0 0
  %1556 = vperm.xlu0 %1555, %v1445
  %v1557 = vpop.permute.xlu0 %1556
  %1558 = vset.pattern.permute.xlu0 0
  %1559 = vperm.xlu0 %1558, %v1446
  %v1560 = vpop.permute.xlu0 %1559
  %1561 = vset.pattern.permute.xlu0 0
  %1562 = vperm.xlu0 %1561, %v1447
  %v1563 = vpop.permute.xlu0 %1562
  %1564 = vset.pattern.permute.xlu0 0
  %1565 = vperm.xlu0 %1564, %v1448
  %v1566 = vpop.permute.xlu0 %1565
  %1567 = vset.pattern.permute.xlu0 0
  %1568 = vperm.xlu0 %1567, %v1449
  %v1569 = vpop.permute.xlu0 %1568
  %1570 = vset.pattern.permute.xlu0 0
  %1571 = vperm.xlu0 %1570, %v1450
  %v1572 = vpop.permute.xlu0 %1571
  %1573 = vset.pattern.permute.xlu0 0
  %1574 = vperm.xlu0 %1573, %v1451
  %v1575 = vpop.permute.xlu0 %1574
  %1576 = vset.pattern.permute.xlu0 0
  %1577 = vperm.xlu0 %1576, %v1452
  %v1578 = vpop.permute.xlu0 %1577
  %1579 = vset.pattern.permute.xlu0 0
  %1580 = vperm.xlu0 %1579, %v1453
  %v1581 = vpop.permute.xlu0 %1580
  %v1582 = vlaneseq
  %v1583 = vshrl.u32 %v1582, 7
  %v1584 = vsub.s32 %v311, %v1583
  %v1585 = vrot.slane %v1488, %v1584
  %v1586 = vlaneseq
  %v1587 = vshrl.u32 %v1586, 7
  %v1588 = vsub.s32 %v316, %v1587
  %v1589 = vrot.slane %v1491, %v1588
  %v1590 = vsel %vm321, %v1589, %v1585
  %v1591 = vlaneseq
  %v1592 = vshrl.u32 %v1591, 7
  %v1593 = vsub.s32 %v323, %v1592
  %v1594 = vrot.slane %v1494, %v1593
  %v1595 = vsel %vm328, %v1594, %v1590
  %v1596 = vlaneseq
  %v1597 = vshrl.u32 %v1596, 7
  %v1598 = vsub.s32 %v330, %v1597
  %v1599 = vrot.slane %v1497, %v1598
  %v1600 = vsel %vm335, %v1599, %v1595
  %v1601 = vlaneseq
  %v1602 = vshrl.u32 %v1601, 7
  %v1603 = vsub.s32 %v337, %v1602
  %v1604 = vrot.slane %v1500, %v1603
  %v1605 = vsel %vm342, %v1604, %v1600
  %v1606 = vlaneseq
  %v1607 = vshrl.u32 %v1606, 7
  %v1608 = vsub.s32 %v344, %v1607
  %v1609 = vrot.slane %v1503, %v1608
  %v1610 = vsel %vm349, %v1609, %v1605
  %v1611 = vlaneseq
  %v1612 = vshrl.u32 %v1611, 7
  %v1613 = vsub.s32 %v351, %v1612
  %v1614 = vrot.slane %v1506, %v1613
  %v1615 = vsel %vm356, %v1614, %v1610
  %v1616 = vlaneseq
  %v1617 = vshrl.u32 %v1616, 7
  %v1618 = vsub.s32 %v358, %v1617
  %v1619 = vrot.slane %v1509, %v1618
  %v1620 = vsel %vm363, %v1619, %v1615
  %v1621 = vlaneseq
  %v1622 = vshrl.u32 %v1621, 7
  %v1623 = vsub.s32 %v365, %v1622
  %v1624 = vrot.slane %v1512, %v1623
  %v1625 = vsel %vm370, %v1624, %v1620
  %v1626 = vlaneseq
  %v1627 = vshrl.u32 %v1626, 7
  %v1628 = vsub.s32 %v372, %v1627
  %v1629 = vrot.slane %v1515, %v1628
  %v1630 = vsel %vm377, %v1629, %v1625
  %v1631 = vlaneseq
  %v1632 = vshrl.u32 %v1631, 7
  %v1633 = vsub.s32 %v379, %v1632
  %v1634 = vrot.slane %v1518, %v1633
  %v1635 = vsel %vm384, %v1634, %v1630
  %v1636 = vlaneseq
  %v1637 = vshrl.u32 %v1636, 7
  %v1638 = vsub.s32 %v386, %v1637
  %v1639 = vrot.slane %v1521, %v1638
  %v1640 = vsel %vm391, %v1639, %v1635
  %v1641 = vlaneseq
  %v1642 = vshrl.u32 %v1641, 7
  %v1643 = vsub.s32 %v393, %v1642
  %v1644 = vrot.slane %v1524, %v1643
  %v1645 = vsel %vm398, %v1644, %v1640
  %v1646 = vlaneseq
  %v1647 = vshrl.u32 %v1646, 7
  %v1648 = vsub.s32 %v400, %v1647
  %v1649 = vrot.slane %v1527, %v1648
  %v1650 = vsel %vm405, %v1649, %v1645
  %v1651 = vlaneseq
  %v1652 = vshrl.u32 %v1651, 7
  %v1653 = vsub.s32 %v407, %v1652
  %v1654 = vrot.slane %v1530, %v1653
  %v1655 = vsel %vm412, %v1654, %v1650
  %v1656 = vlaneseq
  %v1657 = vshrl.u32 %v1656, 7
  %v1658 = vsub.s32 %v414, %v1657
  %v1659 = vrot.slane %v1533, %v1658
  %v1660 = vsel %vm419, %v1659, %v1655
  %v1661 = vlaneseq
  %v1662 = vshrl.u32 %v1661, 7
  %v1663 = vsub.s32 %v311, %v1662
  %v1664 = vrot.slane %v1536, %v1663
  %v1665 = vlaneseq
  %v1666 = vshrl.u32 %v1665, 7
  %v1667 = vsub.s32 %v316, %v1666
  %v1668 = vrot.slane %v1539, %v1667
  %v1669 = vsel %vm321, %v1668, %v1664
  %v1670 = vlaneseq
  %v1671 = vshrl.u32 %v1670, 7
  %v1672 = vsub.s32 %v323, %v1671
  %v1673 = vrot.slane %v1542, %v1672
  %v1674 = vsel %vm328, %v1673, %v1669
  %v1675 = vlaneseq
  %v1676 = vshrl.u32 %v1675, 7
  %v1677 = vsub.s32 %v330, %v1676
  %v1678 = vrot.slane %v1545, %v1677
  %v1679 = vsel %vm335, %v1678, %v1674
  %v1680 = vlaneseq
  %v1681 = vshrl.u32 %v1680, 7
  %v1682 = vsub.s32 %v337, %v1681
  %v1683 = vrot.slane %v1548, %v1682
  %v1684 = vsel %vm342, %v1683, %v1679
  %v1685 = vlaneseq
  %v1686 = vshrl.u32 %v1685, 7
  %v1687 = vsub.s32 %v344, %v1686
  %v1688 = vrot.slane %v1551, %v1687
  %v1689 = vsel %vm349, %v1688, %v1684
  %v1690 = vlaneseq
  %v1691 = vshrl.u32 %v1690, 7
  %v1692 = vsub.s32 %v351, %v1691
  %v1693 = vrot.slane %v1554, %v1692
  %v1694 = vsel %vm356, %v1693, %v1689
  %v1695 = vlaneseq
  %v1696 = vshrl.u32 %v1695, 7
  %v1697 = vsub.s32 %v358, %v1696
  %v1698 = vrot.slane %v1557, %v1697
  %v1699 = vsel %vm363, %v1698, %v1694
  %v1700 = vlaneseq
  %v1701 = vshrl.u32 %v1700, 7
  %v1702 = vsub.s32 %v365, %v1701
  %v1703 = vrot.slane %v1560, %v1702
  %v1704 = vsel %vm370, %v1703, %v1699
  %v1705 = vlaneseq
  %v1706 = vshrl.u32 %v1705, 7
  %v1707 = vsub.s32 %v372, %v1706
  %v1708 = vrot.slane %v1563, %v1707
  %v1709 = vsel %vm377, %v1708, %v1704
  %v1710 = vlaneseq
  %v1711 = vshrl.u32 %v1710, 7
  %v1712 = vsub.s32 %v379, %v1711
  %v1713 = vrot.slane %v1566, %v1712
  %v1714 = vsel %vm384, %v1713, %v1709
  %v1715 = vlaneseq
  %v1716 = vshrl.u32 %v1715, 7
  %v1717 = vsub.s32 %v386, %v1716
  %v1718 = vrot.slane %v1569, %v1717
  %v1719 = vsel %vm391, %v1718, %v1714
  %v1720 = vlaneseq
  %v1721 = vshrl.u32 %v1720, 7
  %v1722 = vsub.s32 %v393, %v1721
  %v1723 = vrot.slane %v1572, %v1722
  %v1724 = vsel %vm398, %v1723, %v1719
  %v1725 = vlaneseq
  %v1726 = vshrl.u32 %v1725, 7
  %v1727 = vsub.s32 %v400, %v1726
  %v1728 = vrot.slane %v1575, %v1727
  %v1729 = vsel %vm405, %v1728, %v1724
  %v1730 = vlaneseq
  %v1731 = vshrl.u32 %v1730, 7
  %v1732 = vsub.s32 %v407, %v1731
  %v1733 = vrot.slane %v1578, %v1732
  %v1734 = vsel %vm412, %v1733, %v1729
  %v1735 = vlaneseq
  %v1736 = vshrl.u32 %v1735, 7
  %v1737 = vsub.s32 %v414, %v1736
  %v1738 = vrot.slane %v1581, %v1737
  %v1739 = vsel %vm419, %v1738, %v1734
  %v1740 = vsel %vm500, %v1739, %v1660
  %v1742 = vadd.f32 %v1329, %v1740
  %v1743 = vmax.f32 %v1742, 0.0
  %v1744 = vld [vmem:[%s3] sm:$0xff]
  %v1745 = vld [vmem:[%s3 + $0x8] sm:$0xff]
  %v1746 = vld [vmem:[%s3 + $0x10] sm:$0xff]
  %v1747 = vld [vmem:[%s3 + $0x18] sm:$0xff]
  %v1748 = vld [vmem:[%s3 + $0x20] sm:$0xff]
  %v1749 = vld [vmem:[%s3 + $0x28] sm:$0xff]
  %v1750 = vld [vmem:[%s3 + $0x30] sm:$0xff]
  %v1751 = vld [vmem:[%s3 + $0x38] sm:$0xff]
  %v1752 = vld [vmem:[%s3 + $0x40] sm:$0xff]
  %v1753 = vld [vmem:[%s3 + $0x48] sm:$0xff]
  %v1754 = vld [vmem:[%s3 + $0x50] sm:$0xff]
  %v1755 = vld [vmem:[%s3 + $0x58] sm:$0xff]
  %v1756 = vld [vmem:[%s3 + $0x60] sm:$0xff]
  %v1757 = vld [vmem:[%s3 + $0x68] sm:$0xff]
  %v1758 = vld [vmem:[%s3 + $0x70] sm:$0xff]
  %v1759 = vld [vmem:[%s3 + $0x78] sm:$0xff]
  %v1760 = vlaneseq
  %v1761 = vshrl.u32 %v1760, 7
  %v1762 = vsub.s32 6, %v1761
  %v1763 = vrot.slane %v47, %v1762
  %1764 = vmatprep.subr.mxu0 0.0
  %1765 = vmatpush1.msra.mxu0 %v1744
  %1766 = vmatprep.subr.mxu0 0.0
  %1767 = vmatpush1.msra.mxu0 %v1745
  %1768 = vmatprep.subr.mxu0 0.0
  %1769 = vmatpush1.msra.mxu0 %v1746
  %1770 = vmatprep.subr.mxu0 0.0
  %1771 = vmatpush1.msra.mxu0 %v1747
  %1772 = vmatprep.subr.mxu0 0.0
  %1773 = vmatpush1.msra.mxu0 %v1748
  %1774 = vmatprep.subr.mxu0 0.0
  %1775 = vmatpush1.msra.mxu0 %v1749
  %1776 = vmatprep.subr.mxu0 0.0
  %1777 = vmatpush1.msra.mxu0 %v1750
  %1778 = vmatprep.subr.mxu0 0.0
  %1779 = vmatpush1.msra.mxu0 %v1751
  %1780 = vmatprep.subr.mxu0 0.0
  %1781 = vmatpush1.msra.mxu0 %v1752
  %1782 = vmatprep.subr.mxu0 0.0
  %1783 = vmatpush1.msra.mxu0 %v1753
  %1784 = vmatprep.subr.mxu0 0.0
  %1785 = vmatpush1.msra.mxu0 %v1754
  %1786 = vmatprep.subr.mxu0 0.0
  %1787 = vmatpush1.msra.mxu0 %v1755
  %1788 = vmatprep.subr.mxu0 0.0
  %1789 = vmatpush1.msra.mxu0 %v1756
  %1790 = vmatprep.subr.mxu0 0.0
  %1791 = vmatpush1.msra.mxu0 %v1757
  %1792 = vmatprep.subr.mxu0 0.0
  %1793 = vmatpush1.msra.mxu0 %v1758
  %1794 = vmatprep.subr.mxu0 0.0
  %1795 = vmatpush1.msra.mxu0 %v1759
  %1796 = vmatprep.subr.mxu0 0.0
  %1797 = vmatpush1.msra.mxu0 0.0
  %1798 = vmatprep.subr.mxu0 0.0
  %1799 = vmatpush1.msra.mxu0 0.0
  %1800 = vmatprep.subr.mxu0 0.0
  %1801 = vmatpush1.msra.mxu0 0.0
  %1802 = vmatprep.subr.mxu0 0.0
  %1803 = vmatpush1.msra.mxu0 0.0
  %1804 = vmatprep.subr.mxu0 0.0
  %1805 = vmatpush1.msra.mxu0 0.0
  %1806 = vmatprep.subr.mxu0 0.0
  %1807 = vmatpush1.msra.mxu0 0.0
  %1808 = vmatprep.subr.mxu0 0.0
  %1809 = vmatpush1.msra.mxu0 0.0
  %1810 = vmatprep.subr.mxu0 0.0
  %1811 = vmatpush1.msra.mxu0 0.0
  %1812 = vmatprep.subr.mxu0 0.0
  %1813 = vmatpush1.msra.mxu0 0.0
  %1814 = vmatprep.subr.mxu0 0.0
  %1815 = vmatpush1.msra.mxu0 0.0
  %1816 = vmatprep.subr.mxu0 0.0
  %1817 = vmatpush1.msra.mxu0 0.0
  %1818 = vmatprep.subr.mxu0 0.0
  %1819 = vmatpush1.msra.mxu0 0.0
  %1820 = vmatprep.subr.mxu0 0.0
  %1821 = vmatpush1.msra.mxu0 0.0
  %1822 = vmatprep.subr.mxu0 0.0
  %1823 = vmatpush1.msra.mxu0 0.0
  %1824 = vmatprep.subr.mxu0 0.0
  %1825 = vmatpush1.msra.mxu0 0.0
  %1826 = vmatprep.subr.mxu0 0.0
  %1827 = vmatpush1.msra.mxu0 0.0
  %1828 = vmatprep.mubr.f32.mxu0 0.0
  %1829 = vmatmul.mubr.f32.gmra.mrb[0].mxu0 %v1743
  %v1830 = vpop.f32.mrb[0].mxu0
  %v1831 = vadd.f32 %v1763, %v1830
  %v1832 = vpop.f32.mrb[0].mxu0
  %1833 = vdwg.mxu0
  %vm1834 = vcmp.lt.s32.totalorder %v311, 32
  %v1835 = vsel %vm1834, %v1831, -1e+30
  %vm1836 = vcmask 1041408
  %v1837 = vsel %vm1836, %v1835, -inf
  %1838 = vmax.xlane.f32.xlu0 %v1837
  %v1839 = vpop.xlane.xlu0 %1838
  %v1840 = vsub.f32 %v1835, %v1839
  %v1841 = vmul.f32 %v1840, 1.442695
  %v1842 = vpow.pop %v1841
  %v1843 = vsel %vm1836, %v1842, 0.0
  %1844 = vadd.xlane.f32.xlu0 %v1843
  %v1845 = vpop.xlane.xlu0 %1844
  %v1846 = vrcp.pop %v1845
  %v1847 = vmul.f32 %v1842, %v1846
  %vm1848 = vcmp.ge.s32.totalorder %v311, 64
  %vm1849 = vcmp.lt.s32.totalorder %v311, 96
  %vm1850 = vmand %vm1848, %vm1849
  %v1851 = vsel %vm1850, %v1742, 0.0
  %vm1852 = vcmp.ge.s32.totalorder %v311, 32
  %v1853 = vsel %vm1852, %v1831, 0.0
  %v1854 = vadd.f32 %v1847, %v1853
  %v1855 = vadd.f32 %v1854, %v1851
  %1856 = vst [vmem:[%s4] sm:$0x3] %v1855
  // Predicated region
  $region18: #{learner_forward.1} parent=0 // pred_check
    _
  $region19: #{learner_forward.1} parent=0 // pred_check_branch
    %1858 = sbr.rel (0) target = $region21
  $region20: #{learner_forward.1} parent=0 // pred_region
    _
  $region21: #{learner_forward.1} parent=0 // pred_fallthru
    _
  // Predicated region
  $region22: #{learner_forward.1} parent=0 // pred_check
    _
  $region23: #{learner_forward.1} parent=0 // pred_check_branch
    %1860 = sbr.rel (0) target = $region25
  $region24: #{learner_forward.1} parent=0 // pred_region
    _
  $region25: #{learner_forward.1} parent=0 // pred_fallthru
    _

</llo_original>
